<compile_context>
chip_gen: v5e
topology: v5e:2x2
jax: 0.10.0
libtpu: 0.0.40
codegen_flags: <defaults>
</compile_context>

<pallas_src>
import functools

import numpy as np
import jax
import jax.numpy as jnp
from jax.experimental import pallas as pl
from jax.experimental.pallas import tpu as pltpu


# ------------------------------ fused kernel -------------------------------

def _net_fused_kernel(x_ref, s_ref, w1_ref, b1_ref, w2t_ref, w3_ref, b3_ref,
                      w4t_ref, fcm_ref, fcb_ref, scal_ref, o_ref):
    x = x_ref[...]            # [1, P]   flattened input pixels (lane-dense)
    w1 = w1_ref[...]          # [64, 9]
    b1 = b1_ref[...]          # [64, 1]
    w2t = w2t_ref[...]        # [9, 64]  conv2 weights, tap-major
    w3 = w3_ref[...]          # [64, 9]
    b3 = b3_ref[...]          # [64, 1]
    w4t = w4t_ref[...]        # [9, 64]

    # scalar params live in SMEM: [b2, b4, gamma1, beta1, gamma2, beta2]
    b2, b4 = scal_ref[0], scal_ref[1]
    g1, be1 = scal_ref[2], scal_ref[3]
    g2, be2 = scal_ref[4], scal_ref[5]

    CENTER = 4                # tap index (oy, ox) == (0, 0)

    def tap_shift(row, t):
        # row: [1, P].  Spatial shift + zero padding for 3x3 tap `t`,
        # realised as row @ S_t (0/1 shift-and-mask matrix, bf16-stored).
        # The center tap is the identity -> no matmul.
        if t == CENTER:
            return row
        idx = t if t < CENTER else t - 1          # table skips the center tap
        return jnp.dot(row, s_ref[idx].astype(jnp.float32),
                       preferred_element_type=jnp.float32)

    def conv_1to64(row, w, b):
        # row [1, P], w [64, 9], b [64, 1]  ->  [64, P]
        acc = None
        for t in range(9):
            term = w[:, t:t + 1] * tap_shift(row, t)     # VPU broadcast-MAC
            acc = term if acc is None else acc + term
        return acc + b

    def conv_64to1(h, wt, bias):
        # h [64, P], wt [9, 64]  ->  [1, P]
        # Channel reduction first (single MXU matmul), then fold the 9 taps
        # back with [1, P] shift matmuls only.
        u = jnp.dot(wt, h, preferred_element_type=jnp.float32)   # [9, P]
        acc = None
        for t in range(9):
            term = tap_shift(u[t:t + 1, :], t)
            acc = term if acc is None else acc + term
        return acc + bias

    def batchnorm(v, gamma, beta):
        # C == 1 -> batch statistics are the mean/var over the whole slab.
        mu = jnp.mean(v)
        var = jnp.mean(jnp.square(v - mu))
        return (v - mu) * jax.lax.rsqrt(var + 1e-5) * gamma + beta

    # conv1 (1 -> 64) + ReLU                                        [64, P]
    h1 = jnp.maximum(conv_1to64(x, w1, b1), 0.0)
    # conv2 (64 -> 1) + ReLU, bn1                                   [1, P]
    a2 = batchnorm(jnp.maximum(conv_64to1(h1, w2t, b2), 0.0), g1, be1)
    # conv3 (1 -> 64) + ReLU
    h3 = jnp.maximum(conv_1to64(a2, w3, b3), 0.0)
    # conv4 (64 -> 1) + ReLU, bn2
    x1 = batchnorm(jnp.maximum(conv_64to1(h3, w4t, b4), 0.0), g2, be2)
    # fc on the trailing width dim (block-diagonal matmul) + residual add
    y = jnp.dot(x1, fcm_ref[...], preferred_element_type=jnp.float32)
    o_ref[...] = x1 + y + fcb_ref[...]


# --------------------- constant tables (host, cached) ----------------------

@functools.lru_cache(maxsize=None)
def _shift_mask_matrices(n, h, w):
    """8 [P, P] 0/1 matrices realising the non-center 3x3 / pad=1 taps on the
    flattened (n, h, w) pixel axis: (row @ S_t)[p] = row[p + oy*w + ox]
    (0 outside the per-image spatial range).  The center tap (identity) is
    handled in-kernel without a matmul."""
    p = np.arange(n * h * w)
    hh = (p // w) % h
    ww = p % w
    mats = []
    for oy in (-1, 0, 1):
        for ox in (-1, 0, 1):
            if oy == 0 and ox == 0:
                continue
            valid = ((hh + oy >= 0) & (hh + oy < h)
                     & (ww + ox >= 0) & (ww + ox < w))
            m = np.zeros((p.size, p.size), np.float32)
            m[(p + oy * w + ox)[valid], p[valid]] = 1.0
            mats.append(m)
    return np.stack(mats)                                           # [8, P, P]


# --------------------------------- wrapper ----------------------------------

@jax.jit
def net_forward(x, p):
    """Pallas implementation of Net.forward.  x: [N, 1, H, W=8] float32 NCHW."""
    N, C, H, W = x.shape
    P = N * C * H * W
    # 0/1 entries are exact in bf16; storing bf16 halves this table's DMA.
    shift = jnp.asarray(_shift_mask_matrices(N * C, H, W),
                        dtype=jnp.bfloat16)                         # [8, P, P]

    xf = x.reshape(1, P)
    w1 = p["w1"].reshape(64, 9)
    b1 = p["b1"].reshape(64, 1)
    w2t = p["w2"].reshape(64, 9).T      # [1, 64, 3, 3] -> [9, 64] (tap-major)
    w3 = p["w3"].reshape(64, 9)
    b3 = p["b3"].reshape(64, 1)
    w4t = p["w4"].reshape(64, 9).T
    # Linear(8, 8) on the trailing dim == block-diagonal [P, P] matmul.
    fcm = jnp.kron(jnp.eye(P // W, dtype=jnp.float32), p["fcw"].T)  # [P, P]
    fcb = jnp.tile(p["fcb"], P // W).reshape(1, P)
    scal = jnp.concatenate([p["b2"], p["b4"], p["g1"], p["be1"],
                            p["g2"], p["be2"]]).astype(jnp.float32)  # [6]

    def vspec(shape):
        return pl.BlockSpec(shape, lambda i, s=shape: (0,) * len(s))

    out = pl.pallas_call(
        _net_fused_kernel,
        out_shape=jax.ShapeDtypeStruct((1, P), jnp.float32),
        grid=(1,),
        in_specs=[vspec((1, P)), vspec((8, P, P)),
                  vspec((64, 9)), vspec((64, 1)), vspec((9, 64)),
                  vspec((64, 9)), vspec((64, 1)), vspec((9, 64)),
                  vspec((P, P)), vspec((1, P)),
                  pl.BlockSpec(memory_space=pltpu.MemorySpace.SMEM)],
        out_specs=vspec((1, P)),
        compiler_params=pltpu.CompilerParams(
            dimension_semantics=("arbitrary",)),
    )(xf, shift, w1, b1, w2t, w3, b3, w4t, fcm, fcb, scal)
    return out.reshape(N, C, H, W)


# ---------------------- deterministic parameter init ------------------------

def init_params(key):
    ks = jax.random.split(key, 10)

    def u(k, shape, fan_in):
        bound = float(fan_in) ** -0.5
        return jax.random.uniform(k, shape, jnp.float32, -bound, bound)

    return dict(
        w1=u(ks[0], (64, 1, 3, 3), 9),    b1=u(ks[1], (64,), 9),
        w2=u(ks[2], (1, 64, 3, 3), 576),  b2=u(ks[3], (1,), 576),
        w3=u(ks[4], (64, 1, 3, 3), 9),    b3=u(ks[5], (64,), 9),
        w4=u(ks[6], (1, 64, 3, 3), 576),  b4=u(ks[7], (1,), 576),
        fcw=u(ks[8], (8, 8), 8),          fcb=u(ks[9], (8,), 8),
        g1=jnp.ones((1,), jnp.float32),   be1=jnp.zeros((1,), jnp.float32),
        g2=jnp.ones((1,), jnp.float32),   be2=jnp.zeros((1,), jnp.float32),
    )


# --------------------------- pure-JAX reference ------------------------------

def _conv_ref(x, w, b):
    y = jax.lax.conv_general_dilated(
        x, w, window_strides=(1, 1), padding=((1, 1), (1, 1)),
        dimension_numbers=("NCHW", "OIHW", "NCHW"),
        precision=jax.lax.Precision.HIGHEST)
    return y + b.reshape(1, -1, 1, 1)


def _bn_ref(x, g, b, eps=1e-5):
    mean = jnp.mean(x, axis=(0, 2, 3), keepdims=True)
    var = jnp.mean(jnp.square(x - mean), axis=(0, 2, 3), keepdims=True)
    return (x - mean) * jax.lax.rsqrt(var + eps) * g.reshape(1, -1, 1, 1) \
        + b.reshape(1, -1, 1, 1)


def net_ref(x, p):
    h = jax.nn.relu(_conv_ref(x, p["w1"], p["b1"]))
    h = jax.nn.relu(_conv_ref(h, p["w2"], p["b2"]))
    h = _bn_ref(h, p["g1"], p["be1"])
    h = jax.nn.relu(_conv_ref(h, p["w3"], p["b3"]))
    h = jax.nn.relu(_conv_ref(h, p["w4"], p["b4"]))
    h = _bn_ref(h, p["g2"], p["be2"])
    fc = jnp.einsum("nchw,ow->ncho", h, p["fcw"],
                    precision=jax.lax.Precision.HIGHEST) + p["fcb"]
    return h + fc


# ----------------------------------- main ------------------------------------

if __name__ == "__main__":
    key = jax.random.PRNGKey(0)
    pkey, xkey = jax.random.split(key)
    params = init_params(pkey)

    # W must equal 8 because of nn.Linear(8, 8) acting on the last dim.
    x = jax.random.normal(xkey, (2, 1, 8, 8), jnp.float32)    # NCHW

    out = net_forward(x, params)
    out = jax.block_until_ready(out)

    ref = net_ref(x, params)
    assert out.shape == x.shape, (out.shape, x.shape)
    if not bool(jnp.allclose(out, ref, rtol=5e-4, atol=5e-4)):
        diff = float(jnp.max(jnp.abs(out - ref)))
        raise AssertionError(f"Pallas output mismatch, max|diff|={diff}")

    print("KERNEL_OK")
</pallas_src>

<mosaic_0001>
module attributes {stable_mosaic.version = 11 : i64} {
  func.func @_net_fused_kernel(%arg0: i32, %arg1: memref<1x128xf32, #tpu.memory_space<vmem>>, %arg2: memref<8x128x128xbf16, #tpu.memory_space<vmem>>, %arg3: memref<64x9xf32, #tpu.memory_space<vmem>>, %arg4: memref<64x1xf32, #tpu.memory_space<vmem>>, %arg5: memref<9x64xf32, #tpu.memory_space<vmem>>, %arg6: memref<64x9xf32, #tpu.memory_space<vmem>>, %arg7: memref<64x1xf32, #tpu.memory_space<vmem>>, %arg8: memref<9x64xf32, #tpu.memory_space<vmem>>, %arg9: memref<128x128xf32, #tpu.memory_space<vmem>>, %arg10: memref<1x128xf32, #tpu.memory_space<vmem>>, %arg11: memref<6xf32, #tpu.memory_space<smem>>, %arg12: memref<1x128xf32, #tpu.memory_space<vmem>>) attributes {dimension_semantics = [#tpu.dimension_semantics<arbitrary>], iteration_bounds = array<i64: 1>, scalar_prefetch = 0 : i64, scratch_operands = 0 : i64, tpu.core_type = #tpu.core_type<tc>, window_params = [{pipeline_mode = #tpu.pipeline_mode<synchronous>, transform_indices = @transform_0, window_bounds = array<i64: 1, 128>}, {pipeline_mode = #tpu.pipeline_mode<synchronous>, transform_indices = @transform_1, window_bounds = array<i64: 8, 128, 128>}, {pipeline_mode = #tpu.pipeline_mode<synchronous>, transform_indices = @transform_2, window_bounds = array<i64: 64, 9>}, {pipeline_mode = #tpu.pipeline_mode<synchronous>, transform_indices = @transform_3, window_bounds = array<i64: 64, 1>}, {pipeline_mode = #tpu.pipeline_mode<synchronous>, transform_indices = @transform_4, window_bounds = array<i64: 9, 64>}, {pipeline_mode = #tpu.pipeline_mode<synchronous>, transform_indices = @transform_5, window_bounds = array<i64: 64, 9>}, {pipeline_mode = #tpu.pipeline_mode<synchronous>, transform_indices = @transform_6, window_bounds = array<i64: 64, 1>}, {pipeline_mode = #tpu.pipeline_mode<synchronous>, transform_indices = @transform_7, window_bounds = array<i64: 9, 64>}, {pipeline_mode = #tpu.pipeline_mode<synchronous>, transform_indices = @transform_8, window_bounds = array<i64: 128, 128>}, {pipeline_mode = #tpu.pipeline_mode<synchronous>, transform_indices = @transform_9, window_bounds = array<i64: 1, 128>}, {transform_indices = @transform_10, window_bounds = array<i64: 6>}, {pipeline_mode = #tpu.pipeline_mode<synchronous>, transform_indices = @transform_11, window_bounds = array<i64: 1, 128>}]} {
    %c0 = arith.constant 0 : index
    %c0_0 = arith.constant 0 : index
    %0 = vector.load %arg1[%c0, %c0_0] : memref<1x128xf32, #tpu.memory_space<vmem>>, vector<1x128xf32>
    %c0_1 = arith.constant 0 : index
    %c0_2 = arith.constant 0 : index
    %1 = vector.load %arg3[%c0_1, %c0_2] : memref<64x9xf32, #tpu.memory_space<vmem>>, vector<64x9xf32>
    %c0_3 = arith.constant 0 : index
    %c0_4 = arith.constant 0 : index
    %2 = vector.load %arg4[%c0_3, %c0_4] : memref<64x1xf32, #tpu.memory_space<vmem>>, vector<64x1xf32>
    %c0_5 = arith.constant 0 : index
    %c0_6 = arith.constant 0 : index
    %3 = vector.load %arg5[%c0_5, %c0_6] : memref<9x64xf32, #tpu.memory_space<vmem>>, vector<9x64xf32>
    %c0_7 = arith.constant 0 : index
    %c0_8 = arith.constant 0 : index
    %4 = vector.load %arg6[%c0_7, %c0_8] : memref<64x9xf32, #tpu.memory_space<vmem>>, vector<64x9xf32>
    %c0_9 = arith.constant 0 : index
    %c0_10 = arith.constant 0 : index
    %5 = vector.load %arg7[%c0_9, %c0_10] : memref<64x1xf32, #tpu.memory_space<vmem>>, vector<64x1xf32>
    %c0_11 = arith.constant 0 : index
    %c0_12 = arith.constant 0 : index
    %6 = vector.load %arg8[%c0_11, %c0_12] : memref<9x64xf32, #tpu.memory_space<vmem>>, vector<9x64xf32>
    %c0_13 = arith.constant 0 : index
    %7 = memref.load %arg11[%c0_13] : memref<6xf32, #tpu.memory_space<smem>>
    %c1 = arith.constant 1 : index
    %8 = memref.load %arg11[%c1] : memref<6xf32, #tpu.memory_space<smem>>
    %c2 = arith.constant 2 : index
    %9 = memref.load %arg11[%c2] : memref<6xf32, #tpu.memory_space<smem>>
    %c3 = arith.constant 3 : index
    %10 = memref.load %arg11[%c3] : memref<6xf32, #tpu.memory_space<smem>>
    %c4 = arith.constant 4 : index
    %11 = memref.load %arg11[%c4] : memref<6xf32, #tpu.memory_space<smem>>
    %c5 = arith.constant 5 : index
    %12 = memref.load %arg11[%c5] : memref<6xf32, #tpu.memory_space<smem>>
    %13 = vector.extract_strided_slice %1 {offsets = [0, 0], sizes = [64, 1], strides = [1, 1]} : vector<64x9xf32> to vector<64x1xf32>
    %c0_14 = arith.constant 0 : index
    %c0_15 = arith.constant 0 : index
    %c0_16 = arith.constant 0 : index
    %14 = vector.load %arg2[%c0_14, %c0_15, %c0_16] : memref<8x128x128xbf16, #tpu.memory_space<vmem>>, vector<1x128x128xbf16>
    %15 = vector.shape_cast %14 : vector<1x128x128xbf16> to vector<128x128xbf16>
    %16 = arith.extf %15 : vector<128x128xbf16> to vector<128x128xf32>
    %cst = arith.constant dense<0.000000e+00> : vector<1x128xf32>
    %17 = tpu.matmul %0, %16, %cst {dimension_numbers = #tpu.dot_dimension_numbers<[1], [0], [0], [1], [0, 0, 1, 1], [], []>} : vector<1x128xf32>, vector<128x128xf32>, vector<1x128xf32> -> vector<1x128xf32>
    %18 = vector.broadcast %13 : vector<64x1xf32> to vector<64x128xf32>
    %19 = vector.broadcast %17 : vector<1x128xf32> to vector<64x128xf32>
    %20 = arith.mulf %18, %19 : vector<64x128xf32>
    %21 = vector.extract_strided_slice %1 {offsets = [0, 1], sizes = [64, 1], strides = [1, 1]} : vector<64x9xf32> to vector<64x1xf32>
    %c1_17 = arith.constant 1 : index
    %c0_18 = arith.constant 0 : index
    %c0_19 = arith.constant 0 : index
    %22 = vector.load %arg2[%c1_17, %c0_18, %c0_19] : memref<8x128x128xbf16, #tpu.memory_space<vmem>>, vector<1x128x128xbf16>
    %23 = vector.shape_cast %22 : vector<1x128x128xbf16> to vector<128x128xbf16>
    %24 = arith.extf %23 : vector<128x128xbf16> to vector<128x128xf32>
    %cst_20 = arith.constant dense<0.000000e+00> : vector<1x128xf32>
    %25 = tpu.matmul %0, %24, %cst_20 {dimension_numbers = #tpu.dot_dimension_numbers<[1], [0], [0], [1], [0, 0, 1, 1], [], []>} : vector<1x128xf32>, vector<128x128xf32>, vector<1x128xf32> -> vector<1x128xf32>
    %26 = vector.broadcast %21 : vector<64x1xf32> to vector<64x128xf32>
    %27 = vector.broadcast %25 : vector<1x128xf32> to vector<64x128xf32>
    %28 = arith.mulf %26, %27 : vector<64x128xf32>
    %29 = arith.addf %20, %28 : vector<64x128xf32>
    %30 = vector.extract_strided_slice %1 {offsets = [0, 2], sizes = [64, 1], strides = [1, 1]} : vector<64x9xf32> to vector<64x1xf32>
    %c2_21 = arith.constant 2 : index
    %c0_22 = arith.constant 0 : index
    %c0_23 = arith.constant 0 : index
    %31 = vector.load %arg2[%c2_21, %c0_22, %c0_23] : memref<8x128x128xbf16, #tpu.memory_space<vmem>>, vector<1x128x128xbf16>
    %32 = vector.shape_cast %31 : vector<1x128x128xbf16> to vector<128x128xbf16>
    %33 = arith.extf %32 : vector<128x128xbf16> to vector<128x128xf32>
    %cst_24 = arith.constant dense<0.000000e+00> : vector<1x128xf32>
    %34 = tpu.matmul %0, %33, %cst_24 {dimension_numbers = #tpu.dot_dimension_numbers<[1], [0], [0], [1], [0, 0, 1, 1], [], []>} : vector<1x128xf32>, vector<128x128xf32>, vector<1x128xf32> -> vector<1x128xf32>
    %35 = vector.broadcast %30 : vector<64x1xf32> to vector<64x128xf32>
    %36 = vector.broadcast %34 : vector<1x128xf32> to vector<64x128xf32>
    %37 = arith.mulf %35, %36 : vector<64x128xf32>
    %38 = arith.addf %29, %37 : vector<64x128xf32>
    %39 = vector.extract_strided_slice %1 {offsets = [0, 3], sizes = [64, 1], strides = [1, 1]} : vector<64x9xf32> to vector<64x1xf32>
    %c3_25 = arith.constant 3 : index
    %c0_26 = arith.constant 0 : index
    %c0_27 = arith.constant 0 : index
    %40 = vector.load %arg2[%c3_25, %c0_26, %c0_27] : memref<8x128x128xbf16, #tpu.memory_space<vmem>>, vector<1x128x128xbf16>
    %41 = vector.shape_cast %40 : vector<1x128x128xbf16> to vector<128x128xbf16>
    %42 = arith.extf %41 : vector<128x128xbf16> to vector<128x128xf32>
    %cst_28 = arith.constant dense<0.000000e+00> : vector<1x128xf32>
    %43 = tpu.matmul %0, %42, %cst_28 {dimension_numbers = #tpu.dot_dimension_numbers<[1], [0], [0], [1], [0, 0, 1, 1], [], []>} : vector<1x128xf32>, vector<128x128xf32>, vector<1x128xf32> -> vector<1x128xf32>
    %44 = vector.broadcast %39 : vector<64x1xf32> to vector<64x128xf32>
    %45 = vector.broadcast %43 : vector<1x128xf32> to vector<64x128xf32>
    %46 = arith.mulf %44, %45 : vector<64x128xf32>
    %47 = arith.addf %38, %46 : vector<64x128xf32>
    %48 = vector.extract_strided_slice %1 {offsets = [0, 4], sizes = [64, 1], strides = [1, 1]} : vector<64x9xf32> to vector<64x1xf32>
    %49 = vector.broadcast %48 : vector<64x1xf32> to vector<64x128xf32>
    %50 = vector.broadcast %0 : vector<1x128xf32> to vector<64x128xf32>
    %51 = arith.mulf %49, %50 : vector<64x128xf32>
    %52 = arith.addf %47, %51 : vector<64x128xf32>
    %53 = vector.extract_strided_slice %1 {offsets = [0, 5], sizes = [64, 1], strides = [1, 1]} : vector<64x9xf32> to vector<64x1xf32>
    %c4_29 = arith.constant 4 : index
    %c0_30 = arith.constant 0 : index
    %c0_31 = arith.constant 0 : index
    %54 = vector.load %arg2[%c4_29, %c0_30, %c0_31] : memref<8x128x128xbf16, #tpu.memory_space<vmem>>, vector<1x128x128xbf16>
    %55 = vector.shape_cast %54 : vector<1x128x128xbf16> to vector<128x128xbf16>
    %56 = arith.extf %55 : vector<128x128xbf16> to vector<128x128xf32>
    %cst_32 = arith.constant dense<0.000000e+00> : vector<1x128xf32>
    %57 = tpu.matmul %0, %56, %cst_32 {dimension_numbers = #tpu.dot_dimension_numbers<[1], [0], [0], [1], [0, 0, 1, 1], [], []>} : vector<1x128xf32>, vector<128x128xf32>, vector<1x128xf32> -> vector<1x128xf32>
    %58 = vector.broadcast %53 : vector<64x1xf32> to vector<64x128xf32>
    %59 = vector.broadcast %57 : vector<1x128xf32> to vector<64x128xf32>
    %60 = arith.mulf %58, %59 : vector<64x128xf32>
    %61 = arith.addf %52, %60 : vector<64x128xf32>
    %62 = vector.extract_strided_slice %1 {offsets = [0, 6], sizes = [64, 1], strides = [1, 1]} : vector<64x9xf32> to vector<64x1xf32>
    %c5_33 = arith.constant 5 : index
    %c0_34 = arith.constant 0 : index
    %c0_35 = arith.constant 0 : index
    %63 = vector.load %arg2[%c5_33, %c0_34, %c0_35] : memref<8x128x128xbf16, #tpu.memory_space<vmem>>, vector<1x128x128xbf16>
    %64 = vector.shape_cast %63 : vector<1x128x128xbf16> to vector<128x128xbf16>
    %65 = arith.extf %64 : vector<128x128xbf16> to vector<128x128xf32>
    %cst_36 = arith.constant dense<0.000000e+00> : vector<1x128xf32>
    %66 = tpu.matmul %0, %65, %cst_36 {dimension_numbers = #tpu.dot_dimension_numbers<[1], [0], [0], [1], [0, 0, 1, 1], [], []>} : vector<1x128xf32>, vector<128x128xf32>, vector<1x128xf32> -> vector<1x128xf32>
    %67 = vector.broadcast %62 : vector<64x1xf32> to vector<64x128xf32>
    %68 = vector.broadcast %66 : vector<1x128xf32> to vector<64x128xf32>
    %69 = arith.mulf %67, %68 : vector<64x128xf32>
    %70 = arith.addf %61, %69 : vector<64x128xf32>
    %71 = vector.extract_strided_slice %1 {offsets = [0, 7], sizes = [64, 1], strides = [1, 1]} : vector<64x9xf32> to vector<64x1xf32>
    %c6 = arith.constant 6 : index
    %c0_37 = arith.constant 0 : index
    %c0_38 = arith.constant 0 : index
    %72 = vector.load %arg2[%c6, %c0_37, %c0_38] : memref<8x128x128xbf16, #tpu.memory_space<vmem>>, vector<1x128x128xbf16>
    %73 = vector.shape_cast %72 : vector<1x128x128xbf16> to vector<128x128xbf16>
    %74 = arith.extf %73 : vector<128x128xbf16> to vector<128x128xf32>
    %cst_39 = arith.constant dense<0.000000e+00> : vector<1x128xf32>
    %75 = tpu.matmul %0, %74, %cst_39 {dimension_numbers = #tpu.dot_dimension_numbers<[1], [0], [0], [1], [0, 0, 1, 1], [], []>} : vector<1x128xf32>, vector<128x128xf32>, vector<1x128xf32> -> vector<1x128xf32>
    %76 = vector.broadcast %71 : vector<64x1xf32> to vector<64x128xf32>
    %77 = vector.broadcast %75 : vector<1x128xf32> to vector<64x128xf32>
    %78 = arith.mulf %76, %77 : vector<64x128xf32>
    %79 = arith.addf %70, %78 : vector<64x128xf32>
    %80 = vector.extract_strided_slice %1 {offsets = [0, 8], sizes = [64, 1], strides = [1, 1]} : vector<64x9xf32> to vector<64x1xf32>
    %c7 = arith.constant 7 : index
    %c0_40 = arith.constant 0 : index
    %c0_41 = arith.constant 0 : index
    %81 = vector.load %arg2[%c7, %c0_40, %c0_41] : memref<8x128x128xbf16, #tpu.memory_space<vmem>>, vector<1x128x128xbf16>
    %82 = vector.shape_cast %81 : vector<1x128x128xbf16> to vector<128x128xbf16>
    %83 = arith.extf %82 : vector<128x128xbf16> to vector<128x128xf32>
    %cst_42 = arith.constant dense<0.000000e+00> : vector<1x128xf32>
    %84 = tpu.matmul %0, %83, %cst_42 {dimension_numbers = #tpu.dot_dimension_numbers<[1], [0], [0], [1], [0, 0, 1, 1], [], []>} : vector<1x128xf32>, vector<128x128xf32>, vector<1x128xf32> -> vector<1x128xf32>
    %85 = vector.broadcast %80 : vector<64x1xf32> to vector<64x128xf32>
    %86 = vector.broadcast %84 : vector<1x128xf32> to vector<64x128xf32>
    %87 = arith.mulf %85, %86 : vector<64x128xf32>
    %88 = arith.addf %79, %87 : vector<64x128xf32>
    %89 = vector.broadcast %2 : vector<64x1xf32> to vector<64x128xf32>
    %90 = arith.addf %88, %89 : vector<64x128xf32>
    %cst_43 = arith.constant 0.000000e+00 : f32
    %91 = vector.broadcast %cst_43 : f32 to vector<64x128xf32>
    %92 = arith.maximumf %90, %91 : vector<64x128xf32>
    %cst_44 = arith.constant dense<0.000000e+00> : vector<9x128xf32>
    %93 = tpu.matmul %3, %92, %cst_44 {dimension_numbers = #tpu.dot_dimension_numbers<[1], [0], [0], [1], [0, 0, 1, 1], [], []>} : vector<9x64xf32>, vector<64x128xf32>, vector<9x128xf32> -> vector<9x128xf32>
    %94 = vector.extract_strided_slice %93 {offsets = [0, 0], sizes = [1, 128], strides = [1, 1]} : vector<9x128xf32> to vector<1x128xf32>
    %c0_45 = arith.constant 0 : index
    %c0_46 = arith.constant 0 : index
    %c0_47 = arith.constant 0 : index
    %95 = vector.load %arg2[%c0_45, %c0_46, %c0_47] : memref<8x128x128xbf16, #tpu.memory_space<vmem>>, vector<1x128x128xbf16>
    %96 = vector.shape_cast %95 : vector<1x128x128xbf16> to vector<128x128xbf16>
    %97 = arith.extf %96 : vector<128x128xbf16> to vector<128x128xf32>
    %cst_48 = arith.constant dense<0.000000e+00> : vector<1x128xf32>
    %98 = tpu.matmul %94, %97, %cst_48 {dimension_numbers = #tpu.dot_dimension_numbers<[1], [0], [0], [1], [0, 0, 1, 1], [], []>} : vector<1x128xf32>, vector<128x128xf32>, vector<1x128xf32> -> vector<1x128xf32>
    %99 = vector.extract_strided_slice %93 {offsets = [1, 0], sizes = [1, 128], strides = [1, 1]} : vector<9x128xf32> to vector<1x128xf32>
    %c1_49 = arith.constant 1 : index
    %c0_50 = arith.constant 0 : index
    %c0_51 = arith.constant 0 : index
    %100 = vector.load %arg2[%c1_49, %c0_50, %c0_51] : memref<8x128x128xbf16, #tpu.memory_space<vmem>>, vector<1x128x128xbf16>
    %101 = vector.shape_cast %100 : vector<1x128x128xbf16> to vector<128x128xbf16>
    %102 = arith.extf %101 : vector<128x128xbf16> to vector<128x128xf32>
    %cst_52 = arith.constant dense<0.000000e+00> : vector<1x128xf32>
    %103 = tpu.matmul %99, %102, %cst_52 {dimension_numbers = #tpu.dot_dimension_numbers<[1], [0], [0], [1], [0, 0, 1, 1], [], []>} : vector<1x128xf32>, vector<128x128xf32>, vector<1x128xf32> -> vector<1x128xf32>
    %104 = arith.addf %98, %103 : vector<1x128xf32>
    %105 = vector.extract_strided_slice %93 {offsets = [2, 0], sizes = [1, 128], strides = [1, 1]} : vector<9x128xf32> to vector<1x128xf32>
    %c2_53 = arith.constant 2 : index
    %c0_54 = arith.constant 0 : index
    %c0_55 = arith.constant 0 : index
    %106 = vector.load %arg2[%c2_53, %c0_54, %c0_55] : memref<8x128x128xbf16, #tpu.memory_space<vmem>>, vector<1x128x128xbf16>
    %107 = vector.shape_cast %106 : vector<1x128x128xbf16> to vector<128x128xbf16>
    %108 = arith.extf %107 : vector<128x128xbf16> to vector<128x128xf32>
    %cst_56 = arith.constant dense<0.000000e+00> : vector<1x128xf32>
    %109 = tpu.matmul %105, %108, %cst_56 {dimension_numbers = #tpu.dot_dimension_numbers<[1], [0], [0], [1], [0, 0, 1, 1], [], []>} : vector<1x128xf32>, vector<128x128xf32>, vector<1x128xf32> -> vector<1x128xf32>
    %110 = arith.addf %104, %109 : vector<1x128xf32>
    %111 = vector.extract_strided_slice %93 {offsets = [3, 0], sizes = [1, 128], strides = [1, 1]} : vector<9x128xf32> to vector<1x128xf32>
    %c3_57 = arith.constant 3 : index
    %c0_58 = arith.constant 0 : index
    %c0_59 = arith.constant 0 : index
    %112 = vector.load %arg2[%c3_57, %c0_58, %c0_59] : memref<8x128x128xbf16, #tpu.memory_space<vmem>>, vector<1x128x128xbf16>
    %113 = vector.shape_cast %112 : vector<1x128x128xbf16> to vector<128x128xbf16>
    %114 = arith.extf %113 : vector<128x128xbf16> to vector<128x128xf32>
    %cst_60 = arith.constant dense<0.000000e+00> : vector<1x128xf32>
    %115 = tpu.matmul %111, %114, %cst_60 {dimension_numbers = #tpu.dot_dimension_numbers<[1], [0], [0], [1], [0, 0, 1, 1], [], []>} : vector<1x128xf32>, vector<128x128xf32>, vector<1x128xf32> -> vector<1x128xf32>
    %116 = arith.addf %110, %115 : vector<1x128xf32>
    %117 = vector.extract_strided_slice %93 {offsets = [4, 0], sizes = [1, 128], strides = [1, 1]} : vector<9x128xf32> to vector<1x128xf32>
    %118 = arith.addf %116, %117 : vector<1x128xf32>
    %119 = vector.extract_strided_slice %93 {offsets = [5, 0], sizes = [1, 128], strides = [1, 1]} : vector<9x128xf32> to vector<1x128xf32>
    %c4_61 = arith.constant 4 : index
    %c0_62 = arith.constant 0 : index
    %c0_63 = arith.constant 0 : index
    %120 = vector.load %arg2[%c4_61, %c0_62, %c0_63] : memref<8x128x128xbf16, #tpu.memory_space<vmem>>, vector<1x128x128xbf16>
    %121 = vector.shape_cast %120 : vector<1x128x128xbf16> to vector<128x128xbf16>
    %122 = arith.extf %121 : vector<128x128xbf16> to vector<128x128xf32>
    %cst_64 = arith.constant dense<0.000000e+00> : vector<1x128xf32>
    %123 = tpu.matmul %119, %122, %cst_64 {dimension_numbers = #tpu.dot_dimension_numbers<[1], [0], [0], [1], [0, 0, 1, 1], [], []>} : vector<1x128xf32>, vector<128x128xf32>, vector<1x128xf32> -> vector<1x128xf32>
    %124 = arith.addf %118, %123 : vector<1x128xf32>
    %125 = vector.extract_strided_slice %93 {offsets = [6, 0], sizes = [1, 128], strides = [1, 1]} : vector<9x128xf32> to vector<1x128xf32>
    %c5_65 = arith.constant 5 : index
    %c0_66 = arith.constant 0 : index
    %c0_67 = arith.constant 0 : index
    %126 = vector.load %arg2[%c5_65, %c0_66, %c0_67] : memref<8x128x128xbf16, #tpu.memory_space<vmem>>, vector<1x128x128xbf16>
    %127 = vector.shape_cast %126 : vector<1x128x128xbf16> to vector<128x128xbf16>
    %128 = arith.extf %127 : vector<128x128xbf16> to vector<128x128xf32>
    %cst_68 = arith.constant dense<0.000000e+00> : vector<1x128xf32>
    %129 = tpu.matmul %125, %128, %cst_68 {dimension_numbers = #tpu.dot_dimension_numbers<[1], [0], [0], [1], [0, 0, 1, 1], [], []>} : vector<1x128xf32>, vector<128x128xf32>, vector<1x128xf32> -> vector<1x128xf32>
    %130 = arith.addf %124, %129 : vector<1x128xf32>
    %131 = vector.extract_strided_slice %93 {offsets = [7, 0], sizes = [1, 128], strides = [1, 1]} : vector<9x128xf32> to vector<1x128xf32>
    %c6_69 = arith.constant 6 : index
    %c0_70 = arith.constant 0 : index
    %c0_71 = arith.constant 0 : index
    %132 = vector.load %arg2[%c6_69, %c0_70, %c0_71] : memref<8x128x128xbf16, #tpu.memory_space<vmem>>, vector<1x128x128xbf16>
    %133 = vector.shape_cast %132 : vector<1x128x128xbf16> to vector<128x128xbf16>
    %134 = arith.extf %133 : vector<128x128xbf16> to vector<128x128xf32>
    %cst_72 = arith.constant dense<0.000000e+00> : vector<1x128xf32>
    %135 = tpu.matmul %131, %134, %cst_72 {dimension_numbers = #tpu.dot_dimension_numbers<[1], [0], [0], [1], [0, 0, 1, 1], [], []>} : vector<1x128xf32>, vector<128x128xf32>, vector<1x128xf32> -> vector<1x128xf32>
    %136 = arith.addf %130, %135 : vector<1x128xf32>
    %137 = vector.extract_strided_slice %93 {offsets = [8, 0], sizes = [1, 128], strides = [1, 1]} : vector<9x128xf32> to vector<1x128xf32>
    %c7_73 = arith.constant 7 : index
    %c0_74 = arith.constant 0 : index
    %c0_75 = arith.constant 0 : index
    %138 = vector.load %arg2[%c7_73, %c0_74, %c0_75] : memref<8x128x128xbf16, #tpu.memory_space<vmem>>, vector<1x128x128xbf16>
    %139 = vector.shape_cast %138 : vector<1x128x128xbf16> to vector<128x128xbf16>
    %140 = arith.extf %139 : vector<128x128xbf16> to vector<128x128xf32>
    %cst_76 = arith.constant dense<0.000000e+00> : vector<1x128xf32>
    %141 = tpu.matmul %137, %140, %cst_76 {dimension_numbers = #tpu.dot_dimension_numbers<[1], [0], [0], [1], [0, 0, 1, 1], [], []>} : vector<1x128xf32>, vector<128x128xf32>, vector<1x128xf32> -> vector<1x128xf32>
    %142 = arith.addf %136, %141 : vector<1x128xf32>
    %143 = vector.broadcast %7 : f32 to vector<1x128xf32>
    %144 = arith.addf %142, %143 : vector<1x128xf32>
    %cst_77 = arith.constant 0.000000e+00 : f32
    %145 = vector.broadcast %cst_77 : f32 to vector<1x128xf32>
    %146 = arith.maximumf %144, %145 : vector<1x128xf32>
    %147 = vector.shape_cast %146 : vector<1x128xf32> to vector<1x1x128xf32>
    %cst_78 = arith.constant dense<0.000000e+00> : vector<1xf32>
    %148 = vector.multi_reduction <add>, %147, %cst_78 [1, 2] : vector<1x1x128xf32> to vector<1xf32>
    %149 = vector.shape_cast %148 : vector<1xf32> to vector<1x1x1xf32>
    %150 = vector.extract %149[0, 0, 0] : f32 from vector<1x1x1xf32>
    %cst_79 = arith.constant 1.280000e+02 : f32
    %151 = arith.divf %150, %cst_79 : f32
    %152 = vector.broadcast %151 : f32 to vector<1x128xf32>
    %153 = arith.subf %146, %152 : vector<1x128xf32>
    %154 = arith.mulf %153, %153 : vector<1x128xf32>
    %155 = vector.shape_cast %154 : vector<1x128xf32> to vector<1x1x128xf32>
    %cst_80 = arith.constant dense<0.000000e+00> : vector<1xf32>
    %156 = vector.multi_reduction <add>, %155, %cst_80 [1, 2] : vector<1x1x128xf32> to vector<1xf32>
    %157 = vector.shape_cast %156 : vector<1xf32> to vector<1x1x1xf32>
    %158 = vector.extract %157[0, 0, 0] : f32 from vector<1x1x1xf32>
    %cst_81 = arith.constant 1.280000e+02 : f32
    %159 = arith.divf %158, %cst_81 : f32
    %160 = vector.broadcast %151 : f32 to vector<1x128xf32>
    %161 = arith.subf %146, %160 : vector<1x128xf32>
    %cst_82 = arith.constant 9.99999974E-6 : f32
    %162 = arith.addf %159, %cst_82 : f32
    %163 = math.rsqrt %162 : f32
    %164 = vector.broadcast %163 : f32 to vector<1x128xf32>
    %165 = arith.mulf %161, %164 : vector<1x128xf32>
    %166 = vector.broadcast %9 : f32 to vector<1x128xf32>
    %167 = arith.mulf %165, %166 : vector<1x128xf32>
    %168 = vector.broadcast %10 : f32 to vector<1x128xf32>
    %169 = arith.addf %167, %168 : vector<1x128xf32>
    %170 = vector.extract_strided_slice %4 {offsets = [0, 0], sizes = [64, 1], strides = [1, 1]} : vector<64x9xf32> to vector<64x1xf32>
    %c0_83 = arith.constant 0 : index
    %c0_84 = arith.constant 0 : index
    %c0_85 = arith.constant 0 : index
    %171 = vector.load %arg2[%c0_83, %c0_84, %c0_85] : memref<8x128x128xbf16, #tpu.memory_space<vmem>>, vector<1x128x128xbf16>
    %172 = vector.shape_cast %171 : vector<1x128x128xbf16> to vector<128x128xbf16>
    %173 = arith.extf %172 : vector<128x128xbf16> to vector<128x128xf32>
    %cst_86 = arith.constant dense<0.000000e+00> : vector<1x128xf32>
    %174 = tpu.matmul %169, %173, %cst_86 {dimension_numbers = #tpu.dot_dimension_numbers<[1], [0], [0], [1], [0, 0, 1, 1], [], []>} : vector<1x128xf32>, vector<128x128xf32>, vector<1x128xf32> -> vector<1x128xf32>
    %175 = vector.broadcast %170 : vector<64x1xf32> to vector<64x128xf32>
    %176 = vector.broadcast %174 : vector<1x128xf32> to vector<64x128xf32>
    %177 = arith.mulf %175, %176 : vector<64x128xf32>
    %178 = vector.extract_strided_slice %4 {offsets = [0, 1], sizes = [64, 1], strides = [1, 1]} : vector<64x9xf32> to vector<64x1xf32>
    %c1_87 = arith.constant 1 : index
    %c0_88 = arith.constant 0 : index
    %c0_89 = arith.constant 0 : index
    %179 = vector.load %arg2[%c1_87, %c0_88, %c0_89] : memref<8x128x128xbf16, #tpu.memory_space<vmem>>, vector<1x128x128xbf16>
    %180 = vector.shape_cast %179 : vector<1x128x128xbf16> to vector<128x128xbf16>
    %181 = arith.extf %180 : vector<128x128xbf16> to vector<128x128xf32>
    %cst_90 = arith.constant dense<0.000000e+00> : vector<1x128xf32>
    %182 = tpu.matmul %169, %181, %cst_90 {dimension_numbers = #tpu.dot_dimension_numbers<[1], [0], [0], [1], [0, 0, 1, 1], [], []>} : vector<1x128xf32>, vector<128x128xf32>, vector<1x128xf32> -> vector<1x128xf32>
    %183 = vector.broadcast %178 : vector<64x1xf32> to vector<64x128xf32>
    %184 = vector.broadcast %182 : vector<1x128xf32> to vector<64x128xf32>
    %185 = arith.mulf %183, %184 : vector<64x128xf32>
    %186 = arith.addf %177, %185 : vector<64x128xf32>
    %187 = vector.extract_strided_slice %4 {offsets = [0, 2], sizes = [64, 1], strides = [1, 1]} : vector<64x9xf32> to vector<64x1xf32>
    %c2_91 = arith.constant 2 : index
    %c0_92 = arith.constant 0 : index
    %c0_93 = arith.constant 0 : index
    %188 = vector.load %arg2[%c2_91, %c0_92, %c0_93] : memref<8x128x128xbf16, #tpu.memory_space<vmem>>, vector<1x128x128xbf16>
    %189 = vector.shape_cast %188 : vector<1x128x128xbf16> to vector<128x128xbf16>
    %190 = arith.extf %189 : vector<128x128xbf16> to vector<128x128xf32>
    %cst_94 = arith.constant dense<0.000000e+00> : vector<1x128xf32>
    %191 = tpu.matmul %169, %190, %cst_94 {dimension_numbers = #tpu.dot_dimension_numbers<[1], [0], [0], [1], [0, 0, 1, 1], [], []>} : vector<1x128xf32>, vector<128x128xf32>, vector<1x128xf32> -> vector<1x128xf32>
    %192 = vector.broadcast %187 : vector<64x1xf32> to vector<64x128xf32>
    %193 = vector.broadcast %191 : vector<1x128xf32> to vector<64x128xf32>
    %194 = arith.mulf %192, %193 : vector<64x128xf32>
    %195 = arith.addf %186, %194 : vector<64x128xf32>
    %196 = vector.extract_strided_slice %4 {offsets = [0, 3], sizes = [64, 1], strides = [1, 1]} : vector<64x9xf32> to vector<64x1xf32>
    %c3_95 = arith.constant 3 : index
    %c0_96 = arith.constant 0 : index
    %c0_97 = arith.constant 0 : index
    %197 = vector.load %arg2[%c3_95, %c0_96, %c0_97] : memref<8x128x128xbf16, #tpu.memory_space<vmem>>, vector<1x128x128xbf16>
    %198 = vector.shape_cast %197 : vector<1x128x128xbf16> to vector<128x128xbf16>
    %199 = arith.extf %198 : vector<128x128xbf16> to vector<128x128xf32>
    %cst_98 = arith.constant dense<0.000000e+00> : vector<1x128xf32>
    %200 = tpu.matmul %169, %199, %cst_98 {dimension_numbers = #tpu.dot_dimension_numbers<[1], [0], [0], [1], [0, 0, 1, 1], [], []>} : vector<1x128xf32>, vector<128x128xf32>, vector<1x128xf32> -> vector<1x128xf32>
    %201 = vector.broadcast %196 : vector<64x1xf32> to vector<64x128xf32>
    %202 = vector.broadcast %200 : vector<1x128xf32> to vector<64x128xf32>
    %203 = arith.mulf %201, %202 : vector<64x128xf32>
    %204 = arith.addf %195, %203 : vector<64x128xf32>
    %205 = vector.extract_strided_slice %4 {offsets = [0, 4], sizes = [64, 1], strides = [1, 1]} : vector<64x9xf32> to vector<64x1xf32>
    %206 = vector.broadcast %205 : vector<64x1xf32> to vector<64x128xf32>
    %207 = vector.broadcast %169 : vector<1x128xf32> to vector<64x128xf32>
    %208 = arith.mulf %206, %207 : vector<64x128xf32>
    %209 = arith.addf %204, %208 : vector<64x128xf32>
    %210 = vector.extract_strided_slice %4 {offsets = [0, 5], sizes = [64, 1], strides = [1, 1]} : vector<64x9xf32> to vector<64x1xf32>
    %c4_99 = arith.constant 4 : index
    %c0_100 = arith.constant 0 : index
    %c0_101 = arith.constant 0 : index
    %211 = vector.load %arg2[%c4_99, %c0_100, %c0_101] : memref<8x128x128xbf16, #tpu.memory_space<vmem>>, vector<1x128x128xbf16>
    %212 = vector.shape_cast %211 : vector<1x128x128xbf16> to vector<128x128xbf16>
    %213 = arith.extf %212 : vector<128x128xbf16> to vector<128x128xf32>
    %cst_102 = arith.constant dense<0.000000e+00> : vector<1x128xf32>
    %214 = tpu.matmul %169, %213, %cst_102 {dimension_numbers = #tpu.dot_dimension_numbers<[1], [0], [0], [1], [0, 0, 1, 1], [], []>} : vector<1x128xf32>, vector<128x128xf32>, vector<1x128xf32> -> vector<1x128xf32>
    %215 = vector.broadcast %210 : vector<64x1xf32> to vector<64x128xf32>
    %216 = vector.broadcast %214 : vector<1x128xf32> to vector<64x128xf32>
    %217 = arith.mulf %215, %216 : vector<64x128xf32>
    %218 = arith.addf %209, %217 : vector<64x128xf32>
    %219 = vector.extract_strided_slice %4 {offsets = [0, 6], sizes = [64, 1], strides = [1, 1]} : vector<64x9xf32> to vector<64x1xf32>
    %c5_103 = arith.constant 5 : index
    %c0_104 = arith.constant 0 : index
    %c0_105 = arith.constant 0 : index
    %220 = vector.load %arg2[%c5_103, %c0_104, %c0_105] : memref<8x128x128xbf16, #tpu.memory_space<vmem>>, vector<1x128x128xbf16>
    %221 = vector.shape_cast %220 : vector<1x128x128xbf16> to vector<128x128xbf16>
    %222 = arith.extf %221 : vector<128x128xbf16> to vector<128x128xf32>
    %cst_106 = arith.constant dense<0.000000e+00> : vector<1x128xf32>
    %223 = tpu.matmul %169, %222, %cst_106 {dimension_numbers = #tpu.dot_dimension_numbers<[1], [0], [0], [1], [0, 0, 1, 1], [], []>} : vector<1x128xf32>, vector<128x128xf32>, vector<1x128xf32> -> vector<1x128xf32>
    %224 = vector.broadcast %219 : vector<64x1xf32> to vector<64x128xf32>
    %225 = vector.broadcast %223 : vector<1x128xf32> to vector<64x128xf32>
    %226 = arith.mulf %224, %225 : vector<64x128xf32>
    %227 = arith.addf %218, %226 : vector<64x128xf32>
    %228 = vector.extract_strided_slice %4 {offsets = [0, 7], sizes = [64, 1], strides = [1, 1]} : vector<64x9xf32> to vector<64x1xf32>
    %c6_107 = arith.constant 6 : index
    %c0_108 = arith.constant 0 : index
    %c0_109 = arith.constant 0 : index
    %229 = vector.load %arg2[%c6_107, %c0_108, %c0_109] : memref<8x128x128xbf16, #tpu.memory_space<vmem>>, vector<1x128x128xbf16>
    %230 = vector.shape_cast %229 : vector<1x128x128xbf16> to vector<128x128xbf16>
    %231 = arith.extf %230 : vector<128x128xbf16> to vector<128x128xf32>
    %cst_110 = arith.constant dense<0.000000e+00> : vector<1x128xf32>
    %232 = tpu.matmul %169, %231, %cst_110 {dimension_numbers = #tpu.dot_dimension_numbers<[1], [0], [0], [1], [0, 0, 1, 1], [], []>} : vector<1x128xf32>, vector<128x128xf32>, vector<1x128xf32> -> vector<1x128xf32>
    %233 = vector.broadcast %228 : vector<64x1xf32> to vector<64x128xf32>
    %234 = vector.broadcast %232 : vector<1x128xf32> to vector<64x128xf32>
    %235 = arith.mulf %233, %234 : vector<64x128xf32>
    %236 = arith.addf %227, %235 : vector<64x128xf32>
    %237 = vector.extract_strided_slice %4 {offsets = [0, 8], sizes = [64, 1], strides = [1, 1]} : vector<64x9xf32> to vector<64x1xf32>
    %c7_111 = arith.constant 7 : index
    %c0_112 = arith.constant 0 : index
    %c0_113 = arith.constant 0 : index
    %238 = vector.load %arg2[%c7_111, %c0_112, %c0_113] : memref<8x128x128xbf16, #tpu.memory_space<vmem>>, vector<1x128x128xbf16>
    %239 = vector.shape_cast %238 : vector<1x128x128xbf16> to vector<128x128xbf16>
    %240 = arith.extf %239 : vector<128x128xbf16> to vector<128x128xf32>
    %cst_114 = arith.constant dense<0.000000e+00> : vector<1x128xf32>
    %241 = tpu.matmul %169, %240, %cst_114 {dimension_numbers = #tpu.dot_dimension_numbers<[1], [0], [0], [1], [0, 0, 1, 1], [], []>} : vector<1x128xf32>, vector<128x128xf32>, vector<1x128xf32> -> vector<1x128xf32>
    %242 = vector.broadcast %237 : vector<64x1xf32> to vector<64x128xf32>
    %243 = vector.broadcast %241 : vector<1x128xf32> to vector<64x128xf32>
    %244 = arith.mulf %242, %243 : vector<64x128xf32>
    %245 = arith.addf %236, %244 : vector<64x128xf32>
    %246 = vector.broadcast %5 : vector<64x1xf32> to vector<64x128xf32>
    %247 = arith.addf %245, %246 : vector<64x128xf32>
    %cst_115 = arith.constant 0.000000e+00 : f32
    %248 = vector.broadcast %cst_115 : f32 to vector<64x128xf32>
    %249 = arith.maximumf %247, %248 : vector<64x128xf32>
    %cst_116 = arith.constant dense<0.000000e+00> : vector<9x128xf32>
    %250 = tpu.matmul %6, %249, %cst_116 {dimension_numbers = #tpu.dot_dimension_numbers<[1], [0], [0], [1], [0, 0, 1, 1], [], []>} : vector<9x64xf32>, vector<64x128xf32>, vector<9x128xf32> -> vector<9x128xf32>
    %251 = vector.extract_strided_slice %250 {offsets = [0, 0], sizes = [1, 128], strides = [1, 1]} : vector<9x128xf32> to vector<1x128xf32>
    %c0_117 = arith.constant 0 : index
    %c0_118 = arith.constant 0 : index
    %c0_119 = arith.constant 0 : index
    %252 = vector.load %arg2[%c0_117, %c0_118, %c0_119] : memref<8x128x128xbf16, #tpu.memory_space<vmem>>, vector<1x128x128xbf16>
    %253 = vector.shape_cast %252 : vector<1x128x128xbf16> to vector<128x128xbf16>
    %254 = arith.extf %253 : vector<128x128xbf16> to vector<128x128xf32>
    %cst_120 = arith.constant dense<0.000000e+00> : vector<1x128xf32>
    %255 = tpu.matmul %251, %254, %cst_120 {dimension_numbers = #tpu.dot_dimension_numbers<[1], [0], [0], [1], [0, 0, 1, 1], [], []>} : vector<1x128xf32>, vector<128x128xf32>, vector<1x128xf32> -> vector<1x128xf32>
    %256 = vector.extract_strided_slice %250 {offsets = [1, 0], sizes = [1, 128], strides = [1, 1]} : vector<9x128xf32> to vector<1x128xf32>
    %c1_121 = arith.constant 1 : index
    %c0_122 = arith.constant 0 : index
    %c0_123 = arith.constant 0 : index
    %257 = vector.load %arg2[%c1_121, %c0_122, %c0_123] : memref<8x128x128xbf16, #tpu.memory_space<vmem>>, vector<1x128x128xbf16>
    %258 = vector.shape_cast %257 : vector<1x128x128xbf16> to vector<128x128xbf16>
    %259 = arith.extf %258 : vector<128x128xbf16> to vector<128x128xf32>
    %cst_124 = arith.constant dense<0.000000e+00> : vector<1x128xf32>
    %260 = tpu.matmul %256, %259, %cst_124 {dimension_numbers = #tpu.dot_dimension_numbers<[1], [0], [0], [1], [0, 0, 1, 1], [], []>} : vector<1x128xf32>, vector<128x128xf32>, vector<1x128xf32> -> vector<1x128xf32>
    %261 = arith.addf %255, %260 : vector<1x128xf32>
    %262 = vector.extract_strided_slice %250 {offsets = [2, 0], sizes = [1, 128], strides = [1, 1]} : vector<9x128xf32> to vector<1x128xf32>
    %c2_125 = arith.constant 2 : index
    %c0_126 = arith.constant 0 : index
    %c0_127 = arith.constant 0 : index
    %263 = vector.load %arg2[%c2_125, %c0_126, %c0_127] : memref<8x128x128xbf16, #tpu.memory_space<vmem>>, vector<1x128x128xbf16>
    %264 = vector.shape_cast %263 : vector<1x128x128xbf16> to vector<128x128xbf16>
    %265 = arith.extf %264 : vector<128x128xbf16> to vector<128x128xf32>
    %cst_128 = arith.constant dense<0.000000e+00> : vector<1x128xf32>
    %266 = tpu.matmul %262, %265, %cst_128 {dimension_numbers = #tpu.dot_dimension_numbers<[1], [0], [0], [1], [0, 0, 1, 1], [], []>} : vector<1x128xf32>, vector<128x128xf32>, vector<1x128xf32> -> vector<1x128xf32>
    %267 = arith.addf %261, %266 : vector<1x128xf32>
    %268 = vector.extract_strided_slice %250 {offsets = [3, 0], sizes = [1, 128], strides = [1, 1]} : vector<9x128xf32> to vector<1x128xf32>
    %c3_129 = arith.constant 3 : index
    %c0_130 = arith.constant 0 : index
    %c0_131 = arith.constant 0 : index
    %269 = vector.load %arg2[%c3_129, %c0_130, %c0_131] : memref<8x128x128xbf16, #tpu.memory_space<vmem>>, vector<1x128x128xbf16>
    %270 = vector.shape_cast %269 : vector<1x128x128xbf16> to vector<128x128xbf16>
    %271 = arith.extf %270 : vector<128x128xbf16> to vector<128x128xf32>
    %cst_132 = arith.constant dense<0.000000e+00> : vector<1x128xf32>
    %272 = tpu.matmul %268, %271, %cst_132 {dimension_numbers = #tpu.dot_dimension_numbers<[1], [0], [0], [1], [0, 0, 1, 1], [], []>} : vector<1x128xf32>, vector<128x128xf32>, vector<1x128xf32> -> vector<1x128xf32>
    %273 = arith.addf %267, %272 : vector<1x128xf32>
    %274 = vector.extract_strided_slice %250 {offsets = [4, 0], sizes = [1, 128], strides = [1, 1]} : vector<9x128xf32> to vector<1x128xf32>
    %275 = arith.addf %273, %274 : vector<1x128xf32>
    %276 = vector.extract_strided_slice %250 {offsets = [5, 0], sizes = [1, 128], strides = [1, 1]} : vector<9x128xf32> to vector<1x128xf32>
    %c4_133 = arith.constant 4 : index
    %c0_134 = arith.constant 0 : index
    %c0_135 = arith.constant 0 : index
    %277 = vector.load %arg2[%c4_133, %c0_134, %c0_135] : memref<8x128x128xbf16, #tpu.memory_space<vmem>>, vector<1x128x128xbf16>
    %278 = vector.shape_cast %277 : vector<1x128x128xbf16> to vector<128x128xbf16>
    %279 = arith.extf %278 : vector<128x128xbf16> to vector<128x128xf32>
    %cst_136 = arith.constant dense<0.000000e+00> : vector<1x128xf32>
    %280 = tpu.matmul %276, %279, %cst_136 {dimension_numbers = #tpu.dot_dimension_numbers<[1], [0], [0], [1], [0, 0, 1, 1], [], []>} : vector<1x128xf32>, vector<128x128xf32>, vector<1x128xf32> -> vector<1x128xf32>
    %281 = arith.addf %275, %280 : vector<1x128xf32>
    %282 = vector.extract_strided_slice %250 {offsets = [6, 0], sizes = [1, 128], strides = [1, 1]} : vector<9x128xf32> to vector<1x128xf32>
    %c5_137 = arith.constant 5 : index
    %c0_138 = arith.constant 0 : index
    %c0_139 = arith.constant 0 : index
    %283 = vector.load %arg2[%c5_137, %c0_138, %c0_139] : memref<8x128x128xbf16, #tpu.memory_space<vmem>>, vector<1x128x128xbf16>
    %284 = vector.shape_cast %283 : vector<1x128x128xbf16> to vector<128x128xbf16>
    %285 = arith.extf %284 : vector<128x128xbf16> to vector<128x128xf32>
    %cst_140 = arith.constant dense<0.000000e+00> : vector<1x128xf32>
    %286 = tpu.matmul %282, %285, %cst_140 {dimension_numbers = #tpu.dot_dimension_numbers<[1], [0], [0], [1], [0, 0, 1, 1], [], []>} : vector<1x128xf32>, vector<128x128xf32>, vector<1x128xf32> -> vector<1x128xf32>
    %287 = arith.addf %281, %286 : vector<1x128xf32>
    %288 = vector.extract_strided_slice %250 {offsets = [7, 0], sizes = [1, 128], strides = [1, 1]} : vector<9x128xf32> to vector<1x128xf32>
    %c6_141 = arith.constant 6 : index
    %c0_142 = arith.constant 0 : index
    %c0_143 = arith.constant 0 : index
    %289 = vector.load %arg2[%c6_141, %c0_142, %c0_143] : memref<8x128x128xbf16, #tpu.memory_space<vmem>>, vector<1x128x128xbf16>
    %290 = vector.shape_cast %289 : vector<1x128x128xbf16> to vector<128x128xbf16>
    %291 = arith.extf %290 : vector<128x128xbf16> to vector<128x128xf32>
    %cst_144 = arith.constant dense<0.000000e+00> : vector<1x128xf32>
    %292 = tpu.matmul %288, %291, %cst_144 {dimension_numbers = #tpu.dot_dimension_numbers<[1], [0], [0], [1], [0, 0, 1, 1], [], []>} : vector<1x128xf32>, vector<128x128xf32>, vector<1x128xf32> -> vector<1x128xf32>
    %293 = arith.addf %287, %292 : vector<1x128xf32>
    %294 = vector.extract_strided_slice %250 {offsets = [8, 0], sizes = [1, 128], strides = [1, 1]} : vector<9x128xf32> to vector<1x128xf32>
    %c7_145 = arith.constant 7 : index
    %c0_146 = arith.constant 0 : index
    %c0_147 = arith.constant 0 : index
    %295 = vector.load %arg2[%c7_145, %c0_146, %c0_147] : memref<8x128x128xbf16, #tpu.memory_space<vmem>>, vector<1x128x128xbf16>
    %296 = vector.shape_cast %295 : vector<1x128x128xbf16> to vector<128x128xbf16>
    %297 = arith.extf %296 : vector<128x128xbf16> to vector<128x128xf32>
    %cst_148 = arith.constant dense<0.000000e+00> : vector<1x128xf32>
    %298 = tpu.matmul %294, %297, %cst_148 {dimension_numbers = #tpu.dot_dimension_numbers<[1], [0], [0], [1], [0, 0, 1, 1], [], []>} : vector<1x128xf32>, vector<128x128xf32>, vector<1x128xf32> -> vector<1x128xf32>
    %299 = arith.addf %293, %298 : vector<1x128xf32>
    %300 = vector.broadcast %8 : f32 to vector<1x128xf32>
    %301 = arith.addf %299, %300 : vector<1x128xf32>
    %cst_149 = arith.constant 0.000000e+00 : f32
    %302 = vector.broadcast %cst_149 : f32 to vector<1x128xf32>
    %303 = arith.maximumf %301, %302 : vector<1x128xf32>
    %304 = vector.shape_cast %303 : vector<1x128xf32> to vector<1x1x128xf32>
    %cst_150 = arith.constant dense<0.000000e+00> : vector<1xf32>
    %305 = vector.multi_reduction <add>, %304, %cst_150 [1, 2] : vector<1x1x128xf32> to vector<1xf32>
    %306 = vector.shape_cast %305 : vector<1xf32> to vector<1x1x1xf32>
    %307 = vector.extract %306[0, 0, 0] : f32 from vector<1x1x1xf32>
    %cst_151 = arith.constant 1.280000e+02 : f32
    %308 = arith.divf %307, %cst_151 : f32
    %309 = vector.broadcast %308 : f32 to vector<1x128xf32>
    %310 = arith.subf %303, %309 : vector<1x128xf32>
    %311 = arith.mulf %310, %310 : vector<1x128xf32>
    %312 = vector.shape_cast %311 : vector<1x128xf32> to vector<1x1x128xf32>
    %cst_152 = arith.constant dense<0.000000e+00> : vector<1xf32>
    %313 = vector.multi_reduction <add>, %312, %cst_152 [1, 2] : vector<1x1x128xf32> to vector<1xf32>
    %314 = vector.shape_cast %313 : vector<1xf32> to vector<1x1x1xf32>
    %315 = vector.extract %314[0, 0, 0] : f32 from vector<1x1x1xf32>
    %cst_153 = arith.constant 1.280000e+02 : f32
    %316 = arith.divf %315, %cst_153 : f32
    %317 = vector.broadcast %308 : f32 to vector<1x128xf32>
    %318 = arith.subf %303, %317 : vector<1x128xf32>
    %cst_154 = arith.constant 9.99999974E-6 : f32
    %319 = arith.addf %316, %cst_154 : f32
    %320 = math.rsqrt %319 : f32
    %321 = vector.broadcast %320 : f32 to vector<1x128xf32>
    %322 = arith.mulf %318, %321 : vector<1x128xf32>
    %323 = vector.broadcast %11 : f32 to vector<1x128xf32>
    %324 = arith.mulf %322, %323 : vector<1x128xf32>
    %325 = vector.broadcast %12 : f32 to vector<1x128xf32>
    %326 = arith.addf %324, %325 : vector<1x128xf32>
    %c0_155 = arith.constant 0 : index
    %c0_156 = arith.constant 0 : index
    %327 = vector.load %arg9[%c0_155, %c0_156] : memref<128x128xf32, #tpu.memory_space<vmem>>, vector<128x128xf32>
    %cst_157 = arith.constant dense<0.000000e+00> : vector<1x128xf32>
    %328 = tpu.matmul %326, %327, %cst_157 {dimension_numbers = #tpu.dot_dimension_numbers<[1], [0], [0], [1], [0, 0, 1, 1], [], []>} : vector<1x128xf32>, vector<128x128xf32>, vector<1x128xf32> -> vector<1x128xf32>
    %329 = arith.addf %326, %328 : vector<1x128xf32>
    %c0_158 = arith.constant 0 : index
    %c0_159 = arith.constant 0 : index
    %330 = vector.load %arg10[%c0_158, %c0_159] : memref<1x128xf32, #tpu.memory_space<vmem>>, vector<1x128xf32>
    %331 = arith.addf %329, %330 : vector<1x128xf32>
    %c0_160 = arith.constant 0 : index
    %c0_161 = arith.constant 0 : index
    %332 = vector.load %arg12[%c0_160, %c0_161] : memref<1x128xf32, #tpu.memory_space<vmem>>, vector<1x128xf32>
    tpu.vector_store %arg12[%c0_160, %c0_161], %331 {strides = array<i32>} : memref<1x128xf32, #tpu.memory_space<vmem>>, vector<1x128xf32>,
    return
  }
  func.func @transform_0(%arg0: i32) -> (i32, i32) {
    %c0_i32 = arith.constant 0 : i32
    %c0_i32_0 = arith.constant 0 : i32
    %c0_i32_1 = arith.constant 0 : i32
    return %c0_i32, %c0_i32_0 : i32, i32
  }
  func.func @transform_1(%arg0: i32) -> (i32, i32, i32) {
    %c0_i32 = arith.constant 0 : i32
    %c0_i32_0 = arith.constant 0 : i32
    %c0_i32_1 = arith.constant 0 : i32
    %c0_i32_2 = arith.constant 0 : i32
    return %c0_i32, %c0_i32_0, %c0_i32_1 : i32, i32, i32
  }
  func.func @transform_2(%arg0: i32) -> (i32, i32) {
    %c0_i32 = arith.constant 0 : i32
    %c0_i32_0 = arith.constant 0 : i32
    %c0_i32_1 = arith.constant 0 : i32
    return %c0_i32, %c0_i32_0 : i32, i32
  }
  func.func @transform_3(%arg0: i32) -> (i32, i32) {
    %c0_i32 = arith.constant 0 : i32
    %c0_i32_0 = arith.constant 0 : i32
    %c0_i32_1 = arith.constant 0 : i32
    return %c0_i32, %c0_i32_0 : i32, i32
  }
  func.func @transform_4(%arg0: i32) -> (i32, i32) {
    %c0_i32 = arith.constant 0 : i32
    %c0_i32_0 = arith.constant 0 : i32
    %c0_i32_1 = arith.constant 0 : i32
    return %c0_i32, %c0_i32_0 : i32, i32
  }
  func.func @transform_5(%arg0: i32) -> (i32, i32) {
    %c0_i32 = arith.constant 0 : i32
    %c0_i32_0 = arith.constant 0 : i32
    %c0_i32_1 = arith.constant 0 : i32
    return %c0_i32, %c0_i32_0 : i32, i32
  }
  func.func @transform_6(%arg0: i32) -> (i32, i32) {
    %c0_i32 = arith.constant 0 : i32
    %c0_i32_0 = arith.constant 0 : i32
    %c0_i32_1 = arith.constant 0 : i32
    return %c0_i32, %c0_i32_0 : i32, i32
  }
  func.func @transform_7(%arg0: i32) -> (i32, i32) {
    %c0_i32 = arith.constant 0 : i32
    %c0_i32_0 = arith.constant 0 : i32
    %c0_i32_1 = arith.constant 0 : i32
    return %c0_i32, %c0_i32_0 : i32, i32
  }
  func.func @transform_8(%arg0: i32) -> (i32, i32) {
    %c0_i32 = arith.constant 0 : i32
    %c0_i32_0 = arith.constant 0 : i32
    %c0_i32_1 = arith.constant 0 : i32
    return %c0_i32, %c0_i32_0 : i32, i32
  }
  func.func @transform_9(%arg0: i32) -> (i32, i32) {
    %c0_i32 = arith.constant 0 : i32
    %c0_i32_0 = arith.constant 0 : i32
    %c0_i32_1 = arith.constant 0 : i32
    return %c0_i32, %c0_i32_0 : i32, i32
  }
  func.func @transform_10(%arg0: i32) -> i32 {
    %c0_i32 = arith.constant 0 : i32
    %c0_i32_0 = arith.constant 0 : i32
    return %c0_i32 : i32
  }
  func.func @transform_11(%arg0: i32) -> (i32, i32) {
    %c0_i32 = arith.constant 0 : i32
    %c0_i32_0 = arith.constant 0 : i32
    %c0_i32_1 = arith.constant 0 : i32
    return %c0_i32, %c0_i32_0 : i32, i32
  }
}

</mosaic_0001>

<llo_original>
// kernel: tile.8
$region0: #{tile.8}
  #allocation0 [shape = 's32[1]{0}', space=sflag, size = 0x4, scoped, tag = 'scoped memory for tile.8']
  %s0 = inlined_call_operand.vmem [shape: f32[8], index: 0, kind: input, shape index: {}]
  %s1 = inlined_call_operand.vmem [shape: f32[16,8], index: 1, kind: output, shape index: {}]
  // Predicated region
  $region2: #{tile.8} parent=0 // pred_check
    _
  $region3: #{tile.8} parent=0 // pred_check_branch
    %3 = sbr.rel (0) target = $region5
  $region4: #{tile.8} parent=0 // pred_region
    _
  $region5: #{tile.8} parent=0 // pred_fallthru
    _
  %v4 = vld [vmem:[%s0] ss:$0 sm:$0xff]
  %5 = vst [vmem:[%s1] sm:$0xff] %v4
  %s6 = scalar_lea.vmem %s1, 8
  %7 = vst [vmem:[%s6] sm:$0xff] %v4

// kernel: tile.9
$region0: #{tile.9}
  %s0 = inlined_call_operand.vmem [shape: f32[16,8], index: 0, kind: input, shape index: {}]
  %s1 = inlined_call_operand.vmem [shape: f32[1,128], index: 1, kind: output, shape index: {}]
  $region1: #{tile.9} parent=0
    #allocation0 [shape = 'u8[4096]{0}', space=vmem, size = 0x1000, scoped, tag = 'scoped mem for output reshape']
    %v2 = vld [vmem:[%s0] sm:$0x1]
    %vm3 = vcmask 64512
    %4 = vst.msk [vmem:[#allocation0] sm:$0x1] %vm3, %v2
    %s5 = scalar_lea.vmem %s0, 15
    %v6 = vld [vmem:[%s5] sm:$0x1]
    %7 = vrot.lane.b32.xlu0 %v6, 120
    %v8 = vpop.permute.xlu0 %7
    %vm9 = vcmask 1048512
    %10 = vst.msk [vmem:[#allocation0] sm:$0x1] %vm9, %v8
    %s11 = scalar_lea.vmem %s0, 14
    %v12 = vld [vmem:[%s11] sm:$0x1]
    %13 = vrot.lane.b32.xlu0 %v12, 112
    %v14 = vpop.permute.xlu0 %13
    %vm15 = vcmask 982912
    %16 = vst.msk [vmem:[#allocation0] sm:$0x1] %vm15, %v14
    %s17 = scalar_lea.vmem %s0, 13
    %v18 = vld [vmem:[%s17] sm:$0x1]
    %19 = vrot.lane.b32.xlu0 %v18, 104
    %v20 = vpop.permute.xlu0 %19
    %vm21 = vcmask 917312
    %22 = vst.msk [vmem:[#allocation0] sm:$0x1] %vm21, %v20
    %s23 = scalar_lea.vmem %s0, 12
    %v24 = vld [vmem:[%s23] sm:$0x1]
    %25 = vrot.lane.b32.xlu0 %v24, 96
    %v26 = vpop.permute.xlu0 %25
    %vm27 = vcmask 851712
    %28 = vst.msk [vmem:[#allocation0] sm:$0x1] %vm27, %v26
    %s29 = scalar_lea.vmem %s0, 11
    %v30 = vld [vmem:[%s29] sm:$0x1]
    %31 = vrot.lane.b32.xlu0 %v30, 88
    %v32 = vpop.permute.xlu0 %31
    %vm33 = vcmask 786112
    %34 = vst.msk [vmem:[#allocation0] sm:$0x1] %vm33, %v32
    %s35 = scalar_lea.vmem %s0, 10
    %v36 = vld [vmem:[%s35] sm:$0x1]
    %37 = vrot.lane.b32.xlu0 %v36, 80
    %v38 = vpop.permute.xlu0 %37
    %vm39 = vcmask 720512
    %40 = vst.msk [vmem:[#allocation0] sm:$0x1] %vm39, %v38
    %s41 = scalar_lea.vmem %s0, 9
    %v42 = vld [vmem:[%s41] sm:$0x1]
    %43 = vrot.lane.b32.xlu0 %v42, 72
    %v44 = vpop.permute.xlu0 %43
    %vm45 = vcmask 654912
    %46 = vst.msk [vmem:[#allocation0] sm:$0x1] %vm45, %v44
    %s47 = scalar_lea.vmem %s0, 8
    %v48 = vld [vmem:[%s47] sm:$0x1]
    %49 = vrot.lane.b32.xlu0 %v48, 64
    %v50 = vpop.permute.xlu0 %49
    %vm51 = vcmask 589312
    %52 = vst.msk [vmem:[#allocation0] sm:$0x1] %vm51, %v50
    %s53 = scalar_lea.vmem %s0, 7
    %v54 = vld [vmem:[%s53] sm:$0x1]
    %55 = vrot.lane.b32.xlu0 %v54, 56
    %v56 = vpop.permute.xlu0 %55
    %vm57 = vcmask 523712
    %58 = vst.msk [vmem:[#allocation0] sm:$0x1] %vm57, %v56
    %s59 = scalar_lea.vmem %s0, 6
    %v60 = vld [vmem:[%s59] sm:$0x1]
    %61 = vrot.lane.b32.xlu0 %v60, 48
    %v62 = vpop.permute.xlu0 %61
    %vm63 = vcmask 458112
    %64 = vst.msk [vmem:[#allocation0] sm:$0x1] %vm63, %v62
    %s65 = scalar_lea.vmem %s0, 5
    %v66 = vld [vmem:[%s65] sm:$0x1]
    %67 = vrot.lane.b32.xlu0 %v66, 40
    %v68 = vpop.permute.xlu0 %67
    %vm69 = vcmask 392512
    %70 = vst.msk [vmem:[#allocation0] sm:$0x1] %vm69, %v68
    %s71 = scalar_lea.vmem %s0, 4
    %v72 = vld [vmem:[%s71] sm:$0x1]
    %73 = vrot.lane.b32.xlu0 %v72, 32
    %v74 = vpop.permute.xlu0 %73
    %vm75 = vcmask 326912
    %76 = vst.msk [vmem:[#allocation0] sm:$0x1] %vm75, %v74
    %s77 = scalar_lea.vmem %s0, 3
    %v78 = vld [vmem:[%s77] sm:$0x1]
    %79 = vrot.lane.b32.xlu0 %v78, 24
    %v80 = vpop.permute.xlu0 %79
    %vm81 = vcmask 261312
    %82 = vst.msk [vmem:[#allocation0] sm:$0x1] %vm81, %v80
    %s83 = scalar_lea.vmem %s0, 2
    %v84 = vld [vmem:[%s83] sm:$0x1]
    %85 = vrot.lane.b32.xlu0 %v84, 16
    %v86 = vpop.permute.xlu0 %85
    %vm87 = vcmask 195712
    %88 = vst.msk [vmem:[#allocation0] sm:$0x1] %vm87, %v86
    %s89 = scalar_lea.vmem %s0, 1
    %v90 = vld [vmem:[%s89] sm:$0x1]
    %91 = vrot.lane.b32.xlu0 %v90, 8
    %v92 = vpop.permute.xlu0 %91
    %vm93 = vcmask 130112
    %94 = vst.msk [vmem:[#allocation0] sm:$0x1] %vm93, %v92
    %s96 = ssub.s32 2, 1
    %v97 = vld [vmem:[#allocation0] sm:%s96]
    %s99 = ssub.s32 2, 1
    %100 = vst [vmem:[%s1] sm:%s99] %v97

// kernel: net_forward.1
$region0: #{net_forward.1}
  #allocation0 [shape = 'u32[]', space=smem, size = 0x4, offset = 0x4, fixed_abs, tag = 'smem constant byte address 0x4 - core index']
  #allocation1 [shape = 'u32[72,128]{1,0:T(1,128)}', space=vmem, size = 0x9000, scoped, tag = 'internal scratch']
  %s0 = inlined_call_operand.vmem [shape: f32[1,128], index: 0, kind: input, shape index: {}]
  %s1 = inlined_call_operand.vmem [shape: bf16[8,128,128], index: 1, kind: input, shape index: {}]
  %s2 = inlined_call_operand.vmem [shape: f32[64,9], index: 2, kind: input, shape index: {}]
  %s3 = inlined_call_operand.vmem [shape: f32[64,1], index: 3, kind: input, shape index: {}]
  %s4 = inlined_call_operand.vmem [shape: f32[9,64], index: 4, kind: input, shape index: {}]
  %s5 = inlined_call_operand.vmem [shape: f32[64,9], index: 5, kind: input, shape index: {}]
  %s6 = inlined_call_operand.vmem [shape: f32[64,1], index: 6, kind: input, shape index: {}]
  %s7 = inlined_call_operand.vmem [shape: f32[9,64], index: 7, kind: input, shape index: {}]
  %s8 = inlined_call_operand.vmem [shape: f32[128,128], index: 8, kind: input, shape index: {}]
  %s9 = inlined_call_operand.vmem [shape: f32[1,128], index: 9, kind: input, shape index: {}]
  %s10 = inlined_call_operand.vmem [shape: f32[6], index: 10, kind: input, shape index: {}]
  %s11 = inlined_call_operand.vmem [shape: f32[1,128], index: 11, kind: output, shape index: {}]
  %s12 = sld [smem:[#allocation0]]
  $region58: #{net_forward.1} parent=0
    _
  %s14 = ssub.s32 1, %s12
  %s15 = scalar_select 0, %s14, %s12
  $region1: #{net_forward.1} parent=0
    #allocation2 [shape = 'u8[512]{0}', space=smem, size = 0x200, scoped, tag = 'input window, operand 10, single buffered']
    #allocation3 [shape = 's32[1]{0}', space=sflag, size = 0x4, scoped, tag = 'scoped memory for net_forward.1']
    %16 = vsyncpa [#allocation3], 0
    // Predicated region
    $region2: #{net_forward.1} parent=1 // pred_check
      _
    $region3: #{net_forward.1} parent=1 // pred_check_branch
      %18 = sbr.rel (0) target = $region5
    $region4: #{net_forward.1} parent=1 // pred_region
      _
    $region5: #{net_forward.1} parent=1 // pred_fallthru
      _
    // Predicated region
    $region6: #{net_forward.1} parent=1 // pred_check
      _
    $region7: #{net_forward.1} parent=1 // pred_check_branch
      %20 = sbr.rel (0) target = $region9
    $region8: #{net_forward.1} parent=1 // pred_region
      _
    $region9: #{net_forward.1} parent=1 // pred_fallthru
      _
    // Predicated region
    $region10: #{net_forward.1} parent=1 // pred_check
      _
    $region11: #{net_forward.1} parent=1 // pred_check_branch
      %22 = sbr.rel (0) target = $region13
    $region12: #{net_forward.1} parent=1 // pred_region
      _
    $region13: #{net_forward.1} parent=1 // pred_fallthru
      _
    // Predicated region
    $region14: #{net_forward.1} parent=1 // pred_check
      _
    $region15: #{net_forward.1} parent=1 // pred_check_branch
      %24 = sbr.rel (0) target = $region17
    $region16: #{net_forward.1} parent=1 // pred_region
      _
    $region17: #{net_forward.1} parent=1 // pred_fallthru
      _
    // Predicated region
    $region18: #{net_forward.1} parent=1 // pred_check
      _
    $region19: #{net_forward.1} parent=1 // pred_check_branch
      %26 = sbr.rel (0) target = $region21
    $region20: #{net_forward.1} parent=1 // pred_region
      _
    $region21: #{net_forward.1} parent=1 // pred_fallthru
      _
    // Predicated region
    $region22: #{net_forward.1} parent=1 // pred_check
      _
    $region23: #{net_forward.1} parent=1 // pred_check_branch
      %28 = sbr.rel (0) target = $region25
    $region24: #{net_forward.1} parent=1 // pred_region
      _
    $region25: #{net_forward.1} parent=1 // pred_fallthru
      _
    // Predicated region
    $region26: #{net_forward.1} parent=1 // pred_check
      _
    $region27: #{net_forward.1} parent=1 // pred_check_branch
      %30 = sbr.rel (0) target = $region29
    $region28: #{net_forward.1} parent=1 // pred_region
      _
    $region29: #{net_forward.1} parent=1 // pred_fallthru
      _
    // Predicated region
    $region30: #{net_forward.1} parent=1 // pred_check
      _
    $region31: #{net_forward.1} parent=1 // pred_check_branch
      %32 = sbr.rel (0) target = $region33
    $region32: #{net_forward.1} parent=1 // pred_region
      _
    $region33: #{net_forward.1} parent=1 // pred_fallthru
      _
    // Predicated region
    $region34: #{net_forward.1} parent=1 // pred_check
      _
    $region35: #{net_forward.1} parent=1 // pred_check_branch
      %34 = sbr.rel (0) target = $region37
    $region36: #{net_forward.1} parent=1 // pred_region
      _
    $region37: #{net_forward.1} parent=1 // pred_fallthru
      _
    // Predicated region
    $region38: #{net_forward.1} parent=1 // pred_check
      _
    $region39: #{net_forward.1} parent=1 // pred_check_branch
      %36 = sbr.rel (0) target = $region41
    $region40: #{net_forward.1} parent=1 // pred_region
      _
    $region41: #{net_forward.1} parent=1 // pred_fallthru
      _
    // Predicated region
    $region42: #{net_forward.1} parent=1 // pred_check
      _
    $region43: #{net_forward.1} parent=1 // pred_check_branch
      %38 = sbr.rel (0) target = $region45
    $region44: #{net_forward.1} parent=1 // pred_region
      %40 = vsyncadd [#allocation3], 0
      %s42 = sshll.u32 %s10, 4
      %s43 = int_to_ptr.vmem [resolvable:$true] %s42
      %45 = dma.vmem_to_smem %s43, 16, [#allocation2], [#allocation3]
    $region45: #{net_forward.1} parent=1 // pred_fallthru
      _
    // Predicated region
    $region46: #{net_forward.1} parent=1 // pred_check
      _
    $region47: #{net_forward.1} parent=1 // pred_check_branch
      %47 = sbr.rel (0) target = $region49
    $region48: #{net_forward.1} parent=1 // pred_region
      %49 = dma.done [#allocation3], 16
    $region49: #{net_forward.1} parent=1 // pred_fallthru
      _
    %50 = sfence
    %v51 = vld [vmem:[%s0] sm:$0x1]
    %v52 = vld [vmem:[%s2] sm:$0xff]
    %v53 = vld [vmem:[%s2 + $0x8] sm:$0xff]
    %v54 = vld [vmem:[%s2 + $0x10] sm:$0xff]
    %v55 = vld [vmem:[%s2 + $0x18] sm:$0xff]
    %v56 = vld [vmem:[%s2 + $0x20] sm:$0xff]
    %v57 = vld [vmem:[%s2 + $0x28] sm:$0xff]
    %v58 = vld [vmem:[%s2 + $0x30] sm:$0xff]
    %v59 = vld [vmem:[%s2 + $0x38] sm:$0xff]
    %v60 = vld [vmem:[%s3] sm:$0xff]
    %v61 = vld [vmem:[%s3 + $0x8] sm:$0xff]
    %v62 = vld [vmem:[%s3 + $0x10] sm:$0xff]
    %v63 = vld [vmem:[%s3 + $0x18] sm:$0xff]
    %v64 = vld [vmem:[%s3 + $0x20] sm:$0xff]
    %v65 = vld [vmem:[%s3 + $0x28] sm:$0xff]
    %v66 = vld [vmem:[%s3 + $0x30] sm:$0xff]
    %v67 = vld [vmem:[%s3 + $0x38] sm:$0xff]
    %v68 = vld [vmem:[%s4] sm:$0xff]
    %v69 = vld [vmem:[%s4 + $0x8] sm:$0x1]
    %v70 = vld [vmem:[%s5] sm:$0xff]
    %v71 = vld [vmem:[%s5 + $0x8] sm:$0xff]
    %v72 = vld [vmem:[%s5 + $0x10] sm:$0xff]
    %v73 = vld [vmem:[%s5 + $0x18] sm:$0xff]
    %v74 = vld [vmem:[%s5 + $0x20] sm:$0xff]
    %v75 = vld [vmem:[%s5 + $0x28] sm:$0xff]
    %v76 = vld [vmem:[%s5 + $0x30] sm:$0xff]
    %v77 = vld [vmem:[%s5 + $0x38] sm:$0xff]
    %v78 = vld [vmem:[%s6] sm:$0xff]
    %v79 = vld [vmem:[%s6 + $0x8] sm:$0xff]
    %v80 = vld [vmem:[%s6 + $0x10] sm:$0xff]
    %v81 = vld [vmem:[%s6 + $0x18] sm:$0xff]
    %v82 = vld [vmem:[%s6 + $0x20] sm:$0xff]
    %v83 = vld [vmem:[%s6 + $0x28] sm:$0xff]
    %v84 = vld [vmem:[%s6 + $0x30] sm:$0xff]
    %v85 = vld [vmem:[%s6 + $0x38] sm:$0xff]
    %v86 = vld [vmem:[%s7] sm:$0xff]
    %v87 = vld [vmem:[%s7 + $0x8] sm:$0x1]
    %s88 = sld [smem:[#allocation2]]
    %s89 = sld [smem:[#allocation2 + $0x1]]
    %s90 = sld [smem:[#allocation2 + $0x2]]
    %s91 = sld [smem:[#allocation2 + $0x3]]
    %s92 = sld [smem:[#allocation2 + $0x4]]
    %s93 = sld [smem:[#allocation2 + $0x5]]
    %v94 = vld [vmem:[%s1] sm:$0xf]
    %v95 = vld [vmem:[%s1 + $0x4] sm:$0xf]
    %v96 = vld [vmem:[%s1 + $0x8] sm:$0xf]
    %v97 = vld [vmem:[%s1 + $0xc] sm:$0xf]
    %v98 = vld [vmem:[%s1 + $0x10] sm:$0xf]
    %v99 = vld [vmem:[%s1 + $0x14] sm:$0xf]
    %v100 = vld [vmem:[%s1 + $0x18] sm:$0xf]
    %v101 = vld [vmem:[%s1 + $0x1c] sm:$0xf]
    %v102 = vld [vmem:[%s1 + $0x20] sm:$0xf]
    %v103 = vld [vmem:[%s1 + $0x24] sm:$0xf]
    %v104 = vld [vmem:[%s1 + $0x28] sm:$0xf]
    %v105 = vld [vmem:[%s1 + $0x2c] sm:$0xf]
    %v106 = vld [vmem:[%s1 + $0x30] sm:$0xf]
    %v107 = vld [vmem:[%s1 + $0x34] sm:$0xf]
    %v108 = vld [vmem:[%s1 + $0x38] sm:$0xf]
    %v109 = vld [vmem:[%s1 + $0x3c] sm:$0xf]
    %v110 = vunpack.c.l.bf16 %v94
    %v111 = vunpack.c.l.bf16 %v95
    %v112 = vunpack.c.l.bf16 %v96
    %v113 = vunpack.c.l.bf16 %v97
    %v114 = vunpack.c.l.bf16 %v98
    %v115 = vunpack.c.l.bf16 %v99
    %v116 = vunpack.c.l.bf16 %v100
    %v117 = vunpack.c.l.bf16 %v101
    %v118 = vunpack.c.l.bf16 %v102
    %v119 = vunpack.c.l.bf16 %v103
    %v120 = vunpack.c.l.bf16 %v104
    %v121 = vunpack.c.l.bf16 %v105
    %v122 = vunpack.c.l.bf16 %v106
    %v123 = vunpack.c.l.bf16 %v107
    %v124 = vunpack.c.l.bf16 %v108
    %v125 = vunpack.c.l.bf16 %v109
    %126 = vmatpush.msra.mxu0 %v125
    %127 = vmatpush.msra.mxu0 %v124
    %128 = vmatpush.msra.mxu0 %v123
    %129 = vmatpush.msra.mxu0 %v122
    %130 = vmatpush.msra.mxu0 %v121
    %131 = vmatpush.msra.mxu0 %v120
    %132 = vmatpush.msra.mxu0 %v119
    %133 = vmatpush.msra.mxu0 %v118
    %134 = vmatpush.msra.mxu0 %v117
    %135 = vmatpush.msra.mxu0 %v116
    %136 = vmatpush.msra.mxu0 %v115
    %137 = vmatpush.msra.mxu0 %v114
    %138 = vmatpush.msra.mxu0 %v113
    %139 = vmatpush.msra.mxu0 %v112
    %140 = vmatpush.msra.mxu0 %v111
    %141 = vmatpush.msra.mxu0 %v110
    %142 = vmatmul.f32.gmra.mxu0 %v51
    %v143 = vpop.f32.mrf.mxu0
    %v144 = vadd.f32 0.0, %v143
    %145 = vdwg.mxu0
    %147 = vset.pattern.permute.xlu0 0
    %148 = vperm.xlu0 %147, %v52
    %v149 = vpop.permute.xlu0 %148
    %152 = vset.pattern.permute.xlu0 0
    %153 = vperm.xlu0 %152, %v53
    %v154 = vpop.permute.xlu0 %153
    %157 = vset.pattern.permute.xlu0 0
    %158 = vperm.xlu0 %157, %v54
    %v159 = vpop.permute.xlu0 %158
    %162 = vset.pattern.permute.xlu0 0
    %163 = vperm.xlu0 %162, %v55
    %v164 = vpop.permute.xlu0 %163
    %167 = vset.pattern.permute.xlu0 0
    %168 = vperm.xlu0 %167, %v56
    %v169 = vpop.permute.xlu0 %168
    %172 = vset.pattern.permute.xlu0 0
    %173 = vperm.xlu0 %172, %v57
    %v174 = vpop.permute.xlu0 %173
    %177 = vset.pattern.permute.xlu0 0
    %178 = vperm.xlu0 %177, %v58
    %v179 = vpop.permute.xlu0 %178
    %182 = vset.pattern.permute.xlu0 0
    %183 = vperm.xlu0 %182, %v59
    %v184 = vpop.permute.xlu0 %183
    %v186 = vperm.slane %v144, 0
    %v187 = vmul.f32 %v149, %v186
    %v188 = vmul.f32 %v154, %v186
    %v189 = vmul.f32 %v159, %v186
    %v190 = vmul.f32 %v164, %v186
    %v191 = vmul.f32 %v169, %v186
    %v192 = vmul.f32 %v174, %v186
    %v193 = vmul.f32 %v179, %v186
    %v194 = vmul.f32 %v184, %v186
    %s195 = scalar_lea.vmem %s1, 64
    %v196 = vld [vmem:[%s195] sm:$0xf]
    %v197 = vld [vmem:[%s195 + $0x4] sm:$0xf]
    %v198 = vld [vmem:[%s195 + $0x8] sm:$0xf]
    %v199 = vld [vmem:[%s195 + $0xc] sm:$0xf]
    %v200 = vld [vmem:[%s195 + $0x10] sm:$0xf]
    %v201 = vld [vmem:[%s195 + $0x14] sm:$0xf]
    %v202 = vld [vmem:[%s195 + $0x18] sm:$0xf]
    %v203 = vld [vmem:[%s195 + $0x1c] sm:$0xf]
    %v204 = vld [vmem:[%s195 + $0x20] sm:$0xf]
    %v205 = vld [vmem:[%s195 + $0x24] sm:$0xf]
    %v206 = vld [vmem:[%s195 + $0x28] sm:$0xf]
    %v207 = vld [vmem:[%s195 + $0x2c] sm:$0xf]
    %v208 = vld [vmem:[%s195 + $0x30] sm:$0xf]
    %v209 = vld [vmem:[%s195 + $0x34] sm:$0xf]
    %v210 = vld [vmem:[%s195 + $0x38] sm:$0xf]
    %v211 = vld [vmem:[%s195 + $0x3c] sm:$0xf]
    %v212 = vunpack.c.l.bf16 %v196
    %v213 = vunpack.c.l.bf16 %v197
    %v214 = vunpack.c.l.bf16 %v198
    %v215 = vunpack.c.l.bf16 %v199
    %v216 = vunpack.c.l.bf16 %v200
    %v217 = vunpack.c.l.bf16 %v201
    %v218 = vunpack.c.l.bf16 %v202
    %v219 = vunpack.c.l.bf16 %v203
    %v220 = vunpack.c.l.bf16 %v204
    %v221 = vunpack.c.l.bf16 %v205
    %v222 = vunpack.c.l.bf16 %v206
    %v223 = vunpack.c.l.bf16 %v207
    %v224 = vunpack.c.l.bf16 %v208
    %v225 = vunpack.c.l.bf16 %v209
    %v226 = vunpack.c.l.bf16 %v210
    %v227 = vunpack.c.l.bf16 %v211
    %228 = vmatpush.msra.mxu0 %v227
    %229 = vmatpush.msra.mxu0 %v226
    %230 = vmatpush.msra.mxu0 %v225
    %231 = vmatpush.msra.mxu0 %v224
    %232 = vmatpush.msra.mxu0 %v223
    %233 = vmatpush.msra.mxu0 %v222
    %234 = vmatpush.msra.mxu0 %v221
    %235 = vmatpush.msra.mxu0 %v220
    %236 = vmatpush.msra.mxu0 %v219
    %237 = vmatpush.msra.mxu0 %v218
    %238 = vmatpush.msra.mxu0 %v217
    %239 = vmatpush.msra.mxu0 %v216
    %240 = vmatpush.msra.mxu0 %v215
    %241 = vmatpush.msra.mxu0 %v214
    %242 = vmatpush.msra.mxu0 %v213
    %243 = vmatpush.msra.mxu0 %v212
    %244 = vmatmul.f32.gmra.mxu0 %v51
    %v245 = vpop.f32.mrf.mxu0
    %v246 = vadd.f32 0.0, %v245
    %247 = vdwg.mxu0
    %248 = vset.pattern.permute.xlu0 1
    %249 = vperm.xlu0 %248, %v52
    %v250 = vpop.permute.xlu0 %249
    %252 = vset.pattern.permute.xlu0 1
    %253 = vperm.xlu0 %252, %v53
    %v254 = vpop.permute.xlu0 %253
    %256 = vset.pattern.permute.xlu0 1
    %257 = vperm.xlu0 %256, %v54
    %v258 = vpop.permute.xlu0 %257
    %260 = vset.pattern.permute.xlu0 1
    %261 = vperm.xlu0 %260, %v55
    %v262 = vpop.permute.xlu0 %261
    %264 = vset.pattern.permute.xlu0 1
    %265 = vperm.xlu0 %264, %v56
    %v266 = vpop.permute.xlu0 %265
    %268 = vset.pattern.permute.xlu0 1
    %269 = vperm.xlu0 %268, %v57
    %v270 = vpop.permute.xlu0 %269
    %272 = vset.pattern.permute.xlu0 1
    %273 = vperm.xlu0 %272, %v58
    %v274 = vpop.permute.xlu0 %273
    %276 = vset.pattern.permute.xlu0 1
    %277 = vperm.xlu0 %276, %v59
    %v278 = vpop.permute.xlu0 %277
    %v280 = vperm.slane %v246, 0
    %v281 = vmul.f32 %v250, %v280
    %v282 = vmul.f32 %v254, %v280
    %v283 = vmul.f32 %v258, %v280
    %v284 = vmul.f32 %v262, %v280
    %v285 = vmul.f32 %v266, %v280
    %v286 = vmul.f32 %v270, %v280
    %v287 = vmul.f32 %v274, %v280
    %v288 = vmul.f32 %v278, %v280
    %v289 = vadd.f32 %v187, %v281
    %v290 = vadd.f32 %v188, %v282
    %v291 = vadd.f32 %v189, %v283
    %v292 = vadd.f32 %v190, %v284
    %v293 = vadd.f32 %v191, %v285
    %v294 = vadd.f32 %v192, %v286
    %v295 = vadd.f32 %v193, %v287
    %v296 = vadd.f32 %v194, %v288
    %s297 = scalar_lea.vmem %s1, 128
    %v298 = vld [vmem:[%s297] sm:$0xf]
    %v299 = vld [vmem:[%s297 + $0x4] sm:$0xf]
    %v300 = vld [vmem:[%s297 + $0x8] sm:$0xf]
    %v301 = vld [vmem:[%s297 + $0xc] sm:$0xf]
    %v302 = vld [vmem:[%s297 + $0x10] sm:$0xf]
    %v303 = vld [vmem:[%s297 + $0x14] sm:$0xf]
    %v304 = vld [vmem:[%s297 + $0x18] sm:$0xf]
    %v305 = vld [vmem:[%s297 + $0x1c] sm:$0xf]
    %v306 = vld [vmem:[%s297 + $0x20] sm:$0xf]
    %v307 = vld [vmem:[%s297 + $0x24] sm:$0xf]
    %v308 = vld [vmem:[%s297 + $0x28] sm:$0xf]
    %v309 = vld [vmem:[%s297 + $0x2c] sm:$0xf]
    %v310 = vld [vmem:[%s297 + $0x30] sm:$0xf]
    %v311 = vld [vmem:[%s297 + $0x34] sm:$0xf]
    %v312 = vld [vmem:[%s297 + $0x38] sm:$0xf]
    %v313 = vld [vmem:[%s297 + $0x3c] sm:$0xf]
    %v314 = vunpack.c.l.bf16 %v298
    %v315 = vunpack.c.l.bf16 %v299
    %v316 = vunpack.c.l.bf16 %v300
    %v317 = vunpack.c.l.bf16 %v301
    %v318 = vunpack.c.l.bf16 %v302
    %v319 = vunpack.c.l.bf16 %v303
    %v320 = vunpack.c.l.bf16 %v304
    %v321 = vunpack.c.l.bf16 %v305
    %v322 = vunpack.c.l.bf16 %v306
    %v323 = vunpack.c.l.bf16 %v307
    %v324 = vunpack.c.l.bf16 %v308
    %v325 = vunpack.c.l.bf16 %v309
    %v326 = vunpack.c.l.bf16 %v310
    %v327 = vunpack.c.l.bf16 %v311
    %v328 = vunpack.c.l.bf16 %v312
    %v329 = vunpack.c.l.bf16 %v313
    %330 = vmatpush.msra.mxu0 %v329
    %331 = vmatpush.msra.mxu0 %v328
    %332 = vmatpush.msra.mxu0 %v327
    %333 = vmatpush.msra.mxu0 %v326
    %334 = vmatpush.msra.mxu0 %v325
    %335 = vmatpush.msra.mxu0 %v324
    %336 = vmatpush.msra.mxu0 %v323
    %337 = vmatpush.msra.mxu0 %v322
    %338 = vmatpush.msra.mxu0 %v321
    %339 = vmatpush.msra.mxu0 %v320
    %340 = vmatpush.msra.mxu0 %v319
    %341 = vmatpush.msra.mxu0 %v318
    %342 = vmatpush.msra.mxu0 %v317
    %343 = vmatpush.msra.mxu0 %v316
    %344 = vmatpush.msra.mxu0 %v315
    %345 = vmatpush.msra.mxu0 %v314
    %346 = vmatmul.f32.gmra.mxu0 %v51
    %v347 = vpop.f32.mrf.mxu0
    %v348 = vadd.f32 0.0, %v347
    %349 = vdwg.mxu0
    %350 = vset.pattern.permute.xlu0 2
    %351 = vperm.xlu0 %350, %v52
    %v352 = vpop.permute.xlu0 %351
    %354 = vset.pattern.permute.xlu0 2
    %355 = vperm.xlu0 %354, %v53
    %v356 = vpop.permute.xlu0 %355
    %358 = vset.pattern.permute.xlu0 2
    %359 = vperm.xlu0 %358, %v54
    %v360 = vpop.permute.xlu0 %359
    %362 = vset.pattern.permute.xlu0 2
    %363 = vperm.xlu0 %362, %v55
    %v364 = vpop.permute.xlu0 %363
    %366 = vset.pattern.permute.xlu0 2
    %367 = vperm.xlu0 %366, %v56
    %v368 = vpop.permute.xlu0 %367
    %370 = vset.pattern.permute.xlu0 2
    %371 = vperm.xlu0 %370, %v57
    %v372 = vpop.permute.xlu0 %371
    %374 = vset.pattern.permute.xlu0 2
    %375 = vperm.xlu0 %374, %v58
    %v376 = vpop.permute.xlu0 %375
    %378 = vset.pattern.permute.xlu0 2
    %379 = vperm.xlu0 %378, %v59
    %v380 = vpop.permute.xlu0 %379
    %v382 = vperm.slane %v348, 0
    %v383 = vmul.f32 %v352, %v382
    %v384 = vmul.f32 %v356, %v382
    %v385 = vmul.f32 %v360, %v382
    %v386 = vmul.f32 %v364, %v382
    %v387 = vmul.f32 %v368, %v382
    %v388 = vmul.f32 %v372, %v382
    %v389 = vmul.f32 %v376, %v382
    %v390 = vmul.f32 %v380, %v382
    %v391 = vadd.f32 %v289, %v383
    %v392 = vadd.f32 %v290, %v384
    %v393 = vadd.f32 %v291, %v385
    %v394 = vadd.f32 %v292, %v386
    %v395 = vadd.f32 %v293, %v387
    %v396 = vadd.f32 %v294, %v388
    %v397 = vadd.f32 %v295, %v389
    %v398 = vadd.f32 %v296, %v390
    %s399 = scalar_lea.vmem %s1, 192
    %v400 = vld [vmem:[%s399] sm:$0xf]
    %v401 = vld [vmem:[%s399 + $0x4] sm:$0xf]
    %v402 = vld [vmem:[%s399 + $0x8] sm:$0xf]
    %v403 = vld [vmem:[%s399 + $0xc] sm:$0xf]
    %v404 = vld [vmem:[%s399 + $0x10] sm:$0xf]
    %v405 = vld [vmem:[%s399 + $0x14] sm:$0xf]
    %v406 = vld [vmem:[%s399 + $0x18] sm:$0xf]
    %v407 = vld [vmem:[%s399 + $0x1c] sm:$0xf]
    %v408 = vld [vmem:[%s399 + $0x20] sm:$0xf]
    %v409 = vld [vmem:[%s399 + $0x24] sm:$0xf]
    %v410 = vld [vmem:[%s399 + $0x28] sm:$0xf]
    %v411 = vld [vmem:[%s399 + $0x2c] sm:$0xf]
    %v412 = vld [vmem:[%s399 + $0x30] sm:$0xf]
    %v413 = vld [vmem:[%s399 + $0x34] sm:$0xf]
    %v414 = vld [vmem:[%s399 + $0x38] sm:$0xf]
    %v415 = vld [vmem:[%s399 + $0x3c] sm:$0xf]
    %v416 = vunpack.c.l.bf16 %v400
    %v417 = vunpack.c.l.bf16 %v401
    %v418 = vunpack.c.l.bf16 %v402
    %v419 = vunpack.c.l.bf16 %v403
    %v420 = vunpack.c.l.bf16 %v404
    %v421 = vunpack.c.l.bf16 %v405
    %v422 = vunpack.c.l.bf16 %v406
    %v423 = vunpack.c.l.bf16 %v407
    %v424 = vunpack.c.l.bf16 %v408
    %v425 = vunpack.c.l.bf16 %v409
    %v426 = vunpack.c.l.bf16 %v410
    %v427 = vunpack.c.l.bf16 %v411
    %v428 = vunpack.c.l.bf16 %v412
    %v429 = vunpack.c.l.bf16 %v413
    %v430 = vunpack.c.l.bf16 %v414
    %v431 = vunpack.c.l.bf16 %v415
    %432 = vmatpush.msra.mxu0 %v431
    %433 = vmatpush.msra.mxu0 %v430
    %434 = vmatpush.msra.mxu0 %v429
    %435 = vmatpush.msra.mxu0 %v428
    %436 = vmatpush.msra.mxu0 %v427
    %437 = vmatpush.msra.mxu0 %v426
    %438 = vmatpush.msra.mxu0 %v425
    %439 = vmatpush.msra.mxu0 %v424
    %440 = vmatpush.msra.mxu0 %v423
    %441 = vmatpush.msra.mxu0 %v422
    %442 = vmatpush.msra.mxu0 %v421
    %443 = vmatpush.msra.mxu0 %v420
    %444 = vmatpush.msra.mxu0 %v419
    %445 = vmatpush.msra.mxu0 %v418
    %446 = vmatpush.msra.mxu0 %v417
    %447 = vmatpush.msra.mxu0 %v416
    %448 = vmatmul.f32.gmra.mxu0 %v51
    %v449 = vpop.f32.mrf.mxu0
    %v450 = vadd.f32 0.0, %v449
    %451 = vdwg.mxu0
    %452 = vset.pattern.permute.xlu0 3
    %453 = vperm.xlu0 %452, %v52
    %v454 = vpop.permute.xlu0 %453
    %456 = vset.pattern.permute.xlu0 3
    %457 = vperm.xlu0 %456, %v53
    %v458 = vpop.permute.xlu0 %457
    %460 = vset.pattern.permute.xlu0 3
    %461 = vperm.xlu0 %460, %v54
    %v462 = vpop.permute.xlu0 %461
    %464 = vset.pattern.permute.xlu0 3
    %465 = vperm.xlu0 %464, %v55
    %v466 = vpop.permute.xlu0 %465
    %468 = vset.pattern.permute.xlu0 3
    %469 = vperm.xlu0 %468, %v56
    %v470 = vpop.permute.xlu0 %469
    %472 = vset.pattern.permute.xlu0 3
    %473 = vperm.xlu0 %472, %v57
    %v474 = vpop.permute.xlu0 %473
    %476 = vset.pattern.permute.xlu0 3
    %477 = vperm.xlu0 %476, %v58
    %v478 = vpop.permute.xlu0 %477
    %480 = vset.pattern.permute.xlu0 3
    %481 = vperm.xlu0 %480, %v59
    %v482 = vpop.permute.xlu0 %481
    %v484 = vperm.slane %v450, 0
    %v485 = vmul.f32 %v454, %v484
    %v486 = vmul.f32 %v458, %v484
    %v487 = vmul.f32 %v462, %v484
    %v488 = vmul.f32 %v466, %v484
    %v489 = vmul.f32 %v470, %v484
    %v490 = vmul.f32 %v474, %v484
    %v491 = vmul.f32 %v478, %v484
    %v492 = vmul.f32 %v482, %v484
    %v493 = vadd.f32 %v391, %v485
    %v494 = vadd.f32 %v392, %v486
    %v495 = vadd.f32 %v393, %v487
    %v496 = vadd.f32 %v394, %v488
    %v497 = vadd.f32 %v395, %v489
    %v498 = vadd.f32 %v396, %v490
    %v499 = vadd.f32 %v397, %v491
    %v500 = vadd.f32 %v398, %v492
    %501 = vset.pattern.permute.xlu0 4
    %502 = vperm.xlu0 %501, %v52
    %v503 = vpop.permute.xlu0 %502
    %505 = vset.pattern.permute.xlu0 4
    %506 = vperm.xlu0 %505, %v53
    %v507 = vpop.permute.xlu0 %506
    %509 = vset.pattern.permute.xlu0 4
    %510 = vperm.xlu0 %509, %v54
    %v511 = vpop.permute.xlu0 %510
    %513 = vset.pattern.permute.xlu0 4
    %514 = vperm.xlu0 %513, %v55
    %v515 = vpop.permute.xlu0 %514
    %517 = vset.pattern.permute.xlu0 4
    %518 = vperm.xlu0 %517, %v56
    %v519 = vpop.permute.xlu0 %518
    %521 = vset.pattern.permute.xlu0 4
    %522 = vperm.xlu0 %521, %v57
    %v523 = vpop.permute.xlu0 %522
    %525 = vset.pattern.permute.xlu0 4
    %526 = vperm.xlu0 %525, %v58
    %v527 = vpop.permute.xlu0 %526
    %529 = vset.pattern.permute.xlu0 4
    %530 = vperm.xlu0 %529, %v59
    %v531 = vpop.permute.xlu0 %530
    %v534 = vperm.slane %v51, 0
    %v536 = vmul.f32 %v503, %v534
    %v537 = vmul.f32 %v507, %v534
    %v538 = vmul.f32 %v511, %v534
    %v539 = vmul.f32 %v515, %v534
    %v540 = vmul.f32 %v519, %v534
    %v541 = vmul.f32 %v523, %v534
    %v542 = vmul.f32 %v527, %v534
    %v543 = vmul.f32 %v531, %v534
    %v544 = vadd.f32 %v493, %v536
    %v545 = vadd.f32 %v494, %v537
    %v546 = vadd.f32 %v495, %v538
    %v547 = vadd.f32 %v496, %v539
    %v548 = vadd.f32 %v497, %v540
    %v549 = vadd.f32 %v498, %v541
    %v550 = vadd.f32 %v499, %v542
    %v551 = vadd.f32 %v500, %v543
    %s552 = scalar_lea.vmem %s1, 256
    %v553 = vld [vmem:[%s552] sm:$0xf]
    %v554 = vld [vmem:[%s552 + $0x4] sm:$0xf]
    %v555 = vld [vmem:[%s552 + $0x8] sm:$0xf]
    %v556 = vld [vmem:[%s552 + $0xc] sm:$0xf]
    %v557 = vld [vmem:[%s552 + $0x10] sm:$0xf]
    %v558 = vld [vmem:[%s552 + $0x14] sm:$0xf]
    %v559 = vld [vmem:[%s552 + $0x18] sm:$0xf]
    %v560 = vld [vmem:[%s552 + $0x1c] sm:$0xf]
    %v561 = vld [vmem:[%s552 + $0x20] sm:$0xf]
    %v562 = vld [vmem:[%s552 + $0x24] sm:$0xf]
    %v563 = vld [vmem:[%s552 + $0x28] sm:$0xf]
    %v564 = vld [vmem:[%s552 + $0x2c] sm:$0xf]
    %v565 = vld [vmem:[%s552 + $0x30] sm:$0xf]
    %v566 = vld [vmem:[%s552 + $0x34] sm:$0xf]
    %v567 = vld [vmem:[%s552 + $0x38] sm:$0xf]
    %v568 = vld [vmem:[%s552 + $0x3c] sm:$0xf]
    %v569 = vunpack.c.l.bf16 %v553
    %v570 = vunpack.c.l.bf16 %v554
    %v571 = vunpack.c.l.bf16 %v555
    %v572 = vunpack.c.l.bf16 %v556
    %v573 = vunpack.c.l.bf16 %v557
    %v574 = vunpack.c.l.bf16 %v558
    %v575 = vunpack.c.l.bf16 %v559
    %v576 = vunpack.c.l.bf16 %v560
    %v577 = vunpack.c.l.bf16 %v561
    %v578 = vunpack.c.l.bf16 %v562
    %v579 = vunpack.c.l.bf16 %v563
    %v580 = vunpack.c.l.bf16 %v564
    %v581 = vunpack.c.l.bf16 %v565
    %v582 = vunpack.c.l.bf16 %v566
    %v583 = vunpack.c.l.bf16 %v567
    %v584 = vunpack.c.l.bf16 %v568
    %585 = vmatpush.msra.mxu0 %v584
    %586 = vmatpush.msra.mxu0 %v583
    %587 = vmatpush.msra.mxu0 %v582
    %588 = vmatpush.msra.mxu0 %v581
    %589 = vmatpush.msra.mxu0 %v580
    %590 = vmatpush.msra.mxu0 %v579
    %591 = vmatpush.msra.mxu0 %v578
    %592 = vmatpush.msra.mxu0 %v577
    %593 = vmatpush.msra.mxu0 %v576
    %594 = vmatpush.msra.mxu0 %v575
    %595 = vmatpush.msra.mxu0 %v574
    %596 = vmatpush.msra.mxu0 %v573
    %597 = vmatpush.msra.mxu0 %v572
    %598 = vmatpush.msra.mxu0 %v571
    %599 = vmatpush.msra.mxu0 %v570
    %600 = vmatpush.msra.mxu0 %v569
    %601 = vmatmul.f32.gmra.mxu0 %v51
    %v602 = vpop.f32.mrf.mxu0
    %v603 = vadd.f32 0.0, %v602
    %604 = vdwg.mxu0
    %605 = vset.pattern.permute.xlu0 5
    %606 = vperm.xlu0 %605, %v52
    %v607 = vpop.permute.xlu0 %606
    %609 = vset.pattern.permute.xlu0 5
    %610 = vperm.xlu0 %609, %v53
    %v611 = vpop.permute.xlu0 %610
    %613 = vset.pattern.permute.xlu0 5
    %614 = vperm.xlu0 %613, %v54
    %v615 = vpop.permute.xlu0 %614
    %617 = vset.pattern.permute.xlu0 5
    %618 = vperm.xlu0 %617, %v55
    %v619 = vpop.permute.xlu0 %618
    %621 = vset.pattern.permute.xlu0 5
    %622 = vperm.xlu0 %621, %v56
    %v623 = vpop.permute.xlu0 %622
    %625 = vset.pattern.permute.xlu0 5
    %626 = vperm.xlu0 %625, %v57
    %v627 = vpop.permute.xlu0 %626
    %629 = vset.pattern.permute.xlu0 5
    %630 = vperm.xlu0 %629, %v58
    %v631 = vpop.permute.xlu0 %630
    %633 = vset.pattern.permute.xlu0 5
    %634 = vperm.xlu0 %633, %v59
    %v635 = vpop.permute.xlu0 %634
    %v637 = vperm.slane %v603, 0
    %v638 = vmul.f32 %v607, %v637
    %v639 = vmul.f32 %v611, %v637
    %v640 = vmul.f32 %v615, %v637
    %v641 = vmul.f32 %v619, %v637
    %v642 = vmul.f32 %v623, %v637
    %v643 = vmul.f32 %v627, %v637
    %v644 = vmul.f32 %v631, %v637
    %v645 = vmul.f32 %v635, %v637
    %v646 = vadd.f32 %v544, %v638
    %v647 = vadd.f32 %v545, %v639
    %v648 = vadd.f32 %v546, %v640
    %v649 = vadd.f32 %v547, %v641
    %v650 = vadd.f32 %v548, %v642
    %v651 = vadd.f32 %v549, %v643
    %v652 = vadd.f32 %v550, %v644
    %v653 = vadd.f32 %v551, %v645
    %s654 = scalar_lea.vmem %s1, 320
    %v655 = vld [vmem:[%s654] sm:$0xf]
    %v656 = vld [vmem:[%s654 + $0x4] sm:$0xf]
    %v657 = vld [vmem:[%s654 + $0x8] sm:$0xf]
    %v658 = vld [vmem:[%s654 + $0xc] sm:$0xf]
    %v659 = vld [vmem:[%s654 + $0x10] sm:$0xf]
    %v660 = vld [vmem:[%s654 + $0x14] sm:$0xf]
    %v661 = vld [vmem:[%s654 + $0x18] sm:$0xf]
    %v662 = vld [vmem:[%s654 + $0x1c] sm:$0xf]
    %v663 = vld [vmem:[%s654 + $0x20] sm:$0xf]
    %v664 = vld [vmem:[%s654 + $0x24] sm:$0xf]
    %v665 = vld [vmem:[%s654 + $0x28] sm:$0xf]
    %v666 = vld [vmem:[%s654 + $0x2c] sm:$0xf]
    %v667 = vld [vmem:[%s654 + $0x30] sm:$0xf]
    %v668 = vld [vmem:[%s654 + $0x34] sm:$0xf]
    %v669 = vld [vmem:[%s654 + $0x38] sm:$0xf]
    %v670 = vld [vmem:[%s654 + $0x3c] sm:$0xf]
    %v671 = vunpack.c.l.bf16 %v655
    %v672 = vunpack.c.l.bf16 %v656
    %v673 = vunpack.c.l.bf16 %v657
    %v674 = vunpack.c.l.bf16 %v658
    %v675 = vunpack.c.l.bf16 %v659
    %v676 = vunpack.c.l.bf16 %v660
    %v677 = vunpack.c.l.bf16 %v661
    %v678 = vunpack.c.l.bf16 %v662
    %v679 = vunpack.c.l.bf16 %v663
    %v680 = vunpack.c.l.bf16 %v664
    %v681 = vunpack.c.l.bf16 %v665
    %v682 = vunpack.c.l.bf16 %v666
    %v683 = vunpack.c.l.bf16 %v667
    %v684 = vunpack.c.l.bf16 %v668
    %v685 = vunpack.c.l.bf16 %v669
    %v686 = vunpack.c.l.bf16 %v670
    %687 = vmatpush.msra.mxu0 %v686
    %688 = vmatpush.msra.mxu0 %v685
    %689 = vmatpush.msra.mxu0 %v684
    %690 = vmatpush.msra.mxu0 %v683
    %691 = vmatpush.msra.mxu0 %v682
    %692 = vmatpush.msra.mxu0 %v681
    %693 = vmatpush.msra.mxu0 %v680
    %694 = vmatpush.msra.mxu0 %v679
    %695 = vmatpush.msra.mxu0 %v678
    %696 = vmatpush.msra.mxu0 %v677
    %697 = vmatpush.msra.mxu0 %v676
    %698 = vmatpush.msra.mxu0 %v675
    %699 = vmatpush.msra.mxu0 %v674
    %700 = vmatpush.msra.mxu0 %v673
    %701 = vmatpush.msra.mxu0 %v672
    %702 = vmatpush.msra.mxu0 %v671
    %703 = vmatmul.f32.gmra.mxu0 %v51
    %v704 = vpop.f32.mrf.mxu0
    %v705 = vadd.f32 0.0, %v704
    %706 = vdwg.mxu0
    %707 = vset.pattern.permute.xlu0 6
    %708 = vperm.xlu0 %707, %v52
    %v709 = vpop.permute.xlu0 %708
    %711 = vset.pattern.permute.xlu0 6
    %712 = vperm.xlu0 %711, %v53
    %v713 = vpop.permute.xlu0 %712
    %715 = vset.pattern.permute.xlu0 6
    %716 = vperm.xlu0 %715, %v54
    %v717 = vpop.permute.xlu0 %716
    %719 = vset.pattern.permute.xlu0 6
    %720 = vperm.xlu0 %719, %v55
    %v721 = vpop.permute.xlu0 %720
    %723 = vset.pattern.permute.xlu0 6
    %724 = vperm.xlu0 %723, %v56
    %v725 = vpop.permute.xlu0 %724
    %727 = vset.pattern.permute.xlu0 6
    %728 = vperm.xlu0 %727, %v57
    %v729 = vpop.permute.xlu0 %728
    %731 = vset.pattern.permute.xlu0 6
    %732 = vperm.xlu0 %731, %v58
    %v733 = vpop.permute.xlu0 %732
    %735 = vset.pattern.permute.xlu0 6
    %736 = vperm.xlu0 %735, %v59
    %v737 = vpop.permute.xlu0 %736
    %v739 = vperm.slane %v705, 0
    %v740 = vmul.f32 %v709, %v739
    %v741 = vmul.f32 %v713, %v739
    %v742 = vmul.f32 %v717, %v739
    %v743 = vmul.f32 %v721, %v739
    %v744 = vmul.f32 %v725, %v739
    %v745 = vmul.f32 %v729, %v739
    %v746 = vmul.f32 %v733, %v739
    %v747 = vmul.f32 %v737, %v739
    %v748 = vadd.f32 %v646, %v740
    %v749 = vadd.f32 %v647, %v741
    %v750 = vadd.f32 %v648, %v742
    %v751 = vadd.f32 %v649, %v743
    %v752 = vadd.f32 %v650, %v744
    %v753 = vadd.f32 %v651, %v745
    %v754 = vadd.f32 %v652, %v746
    %v755 = vadd.f32 %v653, %v747
    %s756 = scalar_lea.vmem %s1, 384
    %v757 = vld [vmem:[%s756] sm:$0xf]
    %v758 = vld [vmem:[%s756 + $0x4] sm:$0xf]
    %v759 = vld [vmem:[%s756 + $0x8] sm:$0xf]
    %v760 = vld [vmem:[%s756 + $0xc] sm:$0xf]
    %v761 = vld [vmem:[%s756 + $0x10] sm:$0xf]
    %v762 = vld [vmem:[%s756 + $0x14] sm:$0xf]
    %v763 = vld [vmem:[%s756 + $0x18] sm:$0xf]
    %v764 = vld [vmem:[%s756 + $0x1c] sm:$0xf]
    %v765 = vld [vmem:[%s756 + $0x20] sm:$0xf]
    %v766 = vld [vmem:[%s756 + $0x24] sm:$0xf]
    %v767 = vld [vmem:[%s756 + $0x28] sm:$0xf]
    %v768 = vld [vmem:[%s756 + $0x2c] sm:$0xf]
    %v769 = vld [vmem:[%s756 + $0x30] sm:$0xf]
    %v770 = vld [vmem:[%s756 + $0x34] sm:$0xf]
    %v771 = vld [vmem:[%s756 + $0x38] sm:$0xf]
    %v772 = vld [vmem:[%s756 + $0x3c] sm:$0xf]
    %v773 = vunpack.c.l.bf16 %v757
    %v774 = vunpack.c.l.bf16 %v758
    %v775 = vunpack.c.l.bf16 %v759
    %v776 = vunpack.c.l.bf16 %v760
    %v777 = vunpack.c.l.bf16 %v761
    %v778 = vunpack.c.l.bf16 %v762
    %v779 = vunpack.c.l.bf16 %v763
    %v780 = vunpack.c.l.bf16 %v764
    %v781 = vunpack.c.l.bf16 %v765
    %v782 = vunpack.c.l.bf16 %v766
    %v783 = vunpack.c.l.bf16 %v767
    %v784 = vunpack.c.l.bf16 %v768
    %v785 = vunpack.c.l.bf16 %v769
    %v786 = vunpack.c.l.bf16 %v770
    %v787 = vunpack.c.l.bf16 %v771
    %v788 = vunpack.c.l.bf16 %v772
    %789 = vmatpush.msra.mxu0 %v788
    %790 = vmatpush.msra.mxu0 %v787
    %791 = vmatpush.msra.mxu0 %v786
    %792 = vmatpush.msra.mxu0 %v785
    %793 = vmatpush.msra.mxu0 %v784
    %794 = vmatpush.msra.mxu0 %v783
    %795 = vmatpush.msra.mxu0 %v782
    %796 = vmatpush.msra.mxu0 %v781
    %797 = vmatpush.msra.mxu0 %v780
    %798 = vmatpush.msra.mxu0 %v779
    %799 = vmatpush.msra.mxu0 %v778
    %800 = vmatpush.msra.mxu0 %v777
    %801 = vmatpush.msra.mxu0 %v776
    %802 = vmatpush.msra.mxu0 %v775
    %803 = vmatpush.msra.mxu0 %v774
    %804 = vmatpush.msra.mxu0 %v773
    %805 = vmatmul.f32.gmra.mxu0 %v51
    %v806 = vpop.f32.mrf.mxu0
    %v807 = vadd.f32 0.0, %v806
    %808 = vdwg.mxu0
    %809 = vset.pattern.permute.xlu0 7
    %810 = vperm.xlu0 %809, %v52
    %v811 = vpop.permute.xlu0 %810
    %813 = vset.pattern.permute.xlu0 7
    %814 = vperm.xlu0 %813, %v53
    %v815 = vpop.permute.xlu0 %814
    %817 = vset.pattern.permute.xlu0 7
    %818 = vperm.xlu0 %817, %v54
    %v819 = vpop.permute.xlu0 %818
    %821 = vset.pattern.permute.xlu0 7
    %822 = vperm.xlu0 %821, %v55
    %v823 = vpop.permute.xlu0 %822
    %825 = vset.pattern.permute.xlu0 7
    %826 = vperm.xlu0 %825, %v56
    %v827 = vpop.permute.xlu0 %826
    %829 = vset.pattern.permute.xlu0 7
    %830 = vperm.xlu0 %829, %v57
    %v831 = vpop.permute.xlu0 %830
    %833 = vset.pattern.permute.xlu0 7
    %834 = vperm.xlu0 %833, %v58
    %v835 = vpop.permute.xlu0 %834
    %837 = vset.pattern.permute.xlu0 7
    %838 = vperm.xlu0 %837, %v59
    %v839 = vpop.permute.xlu0 %838
    %v841 = vperm.slane %v807, 0
    %v842 = vmul.f32 %v811, %v841
    %v843 = vmul.f32 %v815, %v841
    %v844 = vmul.f32 %v819, %v841
    %v845 = vmul.f32 %v823, %v841
    %v846 = vmul.f32 %v827, %v841
    %v847 = vmul.f32 %v831, %v841
    %v848 = vmul.f32 %v835, %v841
    %v849 = vmul.f32 %v839, %v841
    %v850 = vadd.f32 %v748, %v842
    %v851 = vadd.f32 %v749, %v843
    %v852 = vadd.f32 %v750, %v844
    %v853 = vadd.f32 %v751, %v845
    %v854 = vadd.f32 %v752, %v846
    %v855 = vadd.f32 %v753, %v847
    %v856 = vadd.f32 %v754, %v848
    %v857 = vadd.f32 %v755, %v849
    %s858 = scalar_lea.vmem %s1, 448
    %v859 = vld [vmem:[%s858] sm:$0xf]
    %v860 = vld [vmem:[%s858 + $0x4] sm:$0xf]
    %v861 = vld [vmem:[%s858 + $0x8] sm:$0xf]
    %v862 = vld [vmem:[%s858 + $0xc] sm:$0xf]
    %v863 = vld [vmem:[%s858 + $0x10] sm:$0xf]
    %v864 = vld [vmem:[%s858 + $0x14] sm:$0xf]
    %v865 = vld [vmem:[%s858 + $0x18] sm:$0xf]
    %v866 = vld [vmem:[%s858 + $0x1c] sm:$0xf]
    %v867 = vld [vmem:[%s858 + $0x20] sm:$0xf]
    %v868 = vld [vmem:[%s858 + $0x24] sm:$0xf]
    %v869 = vld [vmem:[%s858 + $0x28] sm:$0xf]
    %v870 = vld [vmem:[%s858 + $0x2c] sm:$0xf]
    %v871 = vld [vmem:[%s858 + $0x30] sm:$0xf]
    %v872 = vld [vmem:[%s858 + $0x34] sm:$0xf]
    %v873 = vld [vmem:[%s858 + $0x38] sm:$0xf]
    %v874 = vld [vmem:[%s858 + $0x3c] sm:$0xf]
    %v875 = vunpack.c.l.bf16 %v859
    %v876 = vunpack.c.l.bf16 %v860
    %v877 = vunpack.c.l.bf16 %v861
    %v878 = vunpack.c.l.bf16 %v862
    %v879 = vunpack.c.l.bf16 %v863
    %v880 = vunpack.c.l.bf16 %v864
    %v881 = vunpack.c.l.bf16 %v865
    %v882 = vunpack.c.l.bf16 %v866
    %v883 = vunpack.c.l.bf16 %v867
    %v884 = vunpack.c.l.bf16 %v868
    %v885 = vunpack.c.l.bf16 %v869
    %v886 = vunpack.c.l.bf16 %v870
    %v887 = vunpack.c.l.bf16 %v871
    %v888 = vunpack.c.l.bf16 %v872
    %v889 = vunpack.c.l.bf16 %v873
    %v890 = vunpack.c.l.bf16 %v874
    %891 = vmatpush.msra.mxu0 %v890
    %892 = vmatpush.msra.mxu0 %v889
    %893 = vmatpush.msra.mxu0 %v888
    %894 = vmatpush.msra.mxu0 %v887
    %895 = vmatpush.msra.mxu0 %v886
    %896 = vmatpush.msra.mxu0 %v885
    %897 = vmatpush.msra.mxu0 %v884
    %898 = vmatpush.msra.mxu0 %v883
    %899 = vmatpush.msra.mxu0 %v882
    %900 = vmatpush.msra.mxu0 %v881
    %901 = vmatpush.msra.mxu0 %v880
    %902 = vmatpush.msra.mxu0 %v879
    %903 = vmatpush.msra.mxu0 %v878
    %904 = vmatpush.msra.mxu0 %v877
    %905 = vmatpush.msra.mxu0 %v876
    %906 = vmatpush.msra.mxu0 %v875
    %907 = vmatmul.f32.gmra.mxu0 %v51
    %v908 = vpop.f32.mrf.mxu0
    %v909 = vadd.f32 0.0, %v908
    %910 = vdwg.mxu0
    %911 = vset.pattern.permute.xlu0 8
    %912 = vperm.xlu0 %911, %v52
    %v913 = vpop.permute.xlu0 %912
    %915 = vset.pattern.permute.xlu0 8
    %916 = vperm.xlu0 %915, %v53
    %v917 = vpop.permute.xlu0 %916
    %919 = vset.pattern.permute.xlu0 8
    %920 = vperm.xlu0 %919, %v54
    %v921 = vpop.permute.xlu0 %920
    %923 = vset.pattern.permute.xlu0 8
    %924 = vperm.xlu0 %923, %v55
    %v925 = vpop.permute.xlu0 %924
    %927 = vset.pattern.permute.xlu0 8
    %928 = vperm.xlu0 %927, %v56
    %v929 = vpop.permute.xlu0 %928
    %931 = vset.pattern.permute.xlu0 8
    %932 = vperm.xlu0 %931, %v57
    %v933 = vpop.permute.xlu0 %932
    %935 = vset.pattern.permute.xlu0 8
    %936 = vperm.xlu0 %935, %v58
    %v937 = vpop.permute.xlu0 %936
    %939 = vset.pattern.permute.xlu0 8
    %940 = vperm.xlu0 %939, %v59
    %v941 = vpop.permute.xlu0 %940
    %v943 = vperm.slane %v909, 0
    %v944 = vmul.f32 %v913, %v943
    %v945 = vmul.f32 %v917, %v943
    %v946 = vmul.f32 %v921, %v943
    %v947 = vmul.f32 %v925, %v943
    %v948 = vmul.f32 %v929, %v943
    %v949 = vmul.f32 %v933, %v943
    %v950 = vmul.f32 %v937, %v943
    %v951 = vmul.f32 %v941, %v943
    %v952 = vadd.f32 %v850, %v944
    %v953 = vadd.f32 %v851, %v945
    %v954 = vadd.f32 %v852, %v946
    %v955 = vadd.f32 %v853, %v947
    %v956 = vadd.f32 %v854, %v948
    %v957 = vadd.f32 %v855, %v949
    %v958 = vadd.f32 %v856, %v950
    %v959 = vadd.f32 %v857, %v951
    %961 = vset.pattern.permute.xlu0 0
    %962 = vperm.xlu0 %961, %v60
    %v963 = vpop.permute.xlu0 %962
    %966 = vset.pattern.permute.xlu0 0
    %967 = vperm.xlu0 %966, %v61
    %v968 = vpop.permute.xlu0 %967
    %971 = vset.pattern.permute.xlu0 0
    %972 = vperm.xlu0 %971, %v62
    %v973 = vpop.permute.xlu0 %972
    %976 = vset.pattern.permute.xlu0 0
    %977 = vperm.xlu0 %976, %v63
    %v978 = vpop.permute.xlu0 %977
    %981 = vset.pattern.permute.xlu0 0
    %982 = vperm.xlu0 %981, %v64
    %v983 = vpop.permute.xlu0 %982
    %986 = vset.pattern.permute.xlu0 0
    %987 = vperm.xlu0 %986, %v65
    %v988 = vpop.permute.xlu0 %987
    %991 = vset.pattern.permute.xlu0 0
    %992 = vperm.xlu0 %991, %v66
    %v993 = vpop.permute.xlu0 %992
    %996 = vset.pattern.permute.xlu0 0
    %997 = vperm.xlu0 %996, %v67
    %v998 = vpop.permute.xlu0 %997
    %v1000 = vadd.f32 %v952, %v963
    %v1001 = vadd.f32 %v953, %v968
    %v1002 = vadd.f32 %v954, %v973
    %v1003 = vadd.f32 %v955, %v978
    %v1004 = vadd.f32 %v956, %v983
    %v1005 = vadd.f32 %v957, %v988
    %v1006 = vadd.f32 %v958, %v993
    %v1007 = vadd.f32 %v959, %v998
    %v1008 = vmax.f32 %v1000, 0.0
    %v1009 = vmax.f32 %v1001, 0.0
    %v1010 = vmax.f32 %v1002, 0.0
    %v1011 = vmax.f32 %v1003, 0.0
    %v1012 = vmax.f32 %v1004, 0.0
    %v1013 = vmax.f32 %v1005, 0.0
    %v1014 = vmax.f32 %v1006, 0.0
    %v1015 = vmax.f32 %v1007, 0.0
    %vm1016 = vcmask 523264
    %v1018 = vsel %vm1016, %v68, 0
    %v1021 = vsel %vm1016, %v69, 0
    %1023 = vmatpush.msra.mxu0 0.0
    %1024 = vmatpush.msra.mxu0 0.0
    %1025 = vmatpush.msra.mxu0 0.0
    %1026 = vmatpush.msra.mxu0 0.0
    %1027 = vmatpush.msra.mxu0 0.0
    %1028 = vmatpush.msra.mxu0 0.0
    %1029 = vmatpush.msra.mxu0 0.0
    %1030 = vmatpush.msra.mxu0 0.0
    %1031 = vmatpush.msra.mxu0 %v1015
    %1032 = vmatpush.msra.mxu0 %v1014
    %1033 = vmatpush.msra.mxu0 %v1013
    %1034 = vmatpush.msra.mxu0 %v1012
    %1035 = vmatpush.msra.mxu0 %v1011
    %1036 = vmatpush.msra.mxu0 %v1010
    %1037 = vmatpush.msra.mxu0 %v1009
    %1038 = vmatpush.msra.mxu0 %v1008
    %1039 = vmatmul.f32.gmra.mxu0 %v1018
    %v1040 = vpop.f32.mrf.mxu0
    %v1041 = vadd.f32 0.0, %v1040
    %1042 = vmatmul.f32.gmra.mxu0 %v1021
    %v1043 = vpop.f32.mrf.mxu0
    %v1044 = vadd.f32 0.0, %v1043
    %1045 = vdwg.mxu0
    %v1047 = vrot.slane %v1041, 1
    %1049 = vmatpush.msra.mxu0 %v227
    %1050 = vmatpush.msra.mxu0 %v226
    %1051 = vmatpush.msra.mxu0 %v225
    %1052 = vmatpush.msra.mxu0 %v224
    %1053 = vmatpush.msra.mxu0 %v223
    %1054 = vmatpush.msra.mxu0 %v222
    %1055 = vmatpush.msra.mxu0 %v221
    %1056 = vmatpush.msra.mxu0 %v220
    %1057 = vmatpush.msra.mxu0 %v219
    %1058 = vmatpush.msra.mxu0 %v218
    %1059 = vmatpush.msra.mxu0 %v217
    %1060 = vmatpush.msra.mxu0 %v216
    %1061 = vmatpush.msra.mxu0 %v215
    %1062 = vmatpush.msra.mxu0 %v214
    %1063 = vmatpush.msra.mxu0 %v213
    %1064 = vmatpush.msra.mxu0 %v212
    %1065 = vmatmul.f32.gmra.mxu0 %v1047
    %v1066 = vpop.f32.mrf.mxu0
    %v1067 = vadd.f32 0.0, %v1066
    %1068 = vdwg.mxu0
    %1069 = vmatpush.msra.mxu0 %v125
    %1070 = vmatpush.msra.mxu0 %v124
    %1071 = vmatpush.msra.mxu0 %v123
    %1072 = vmatpush.msra.mxu0 %v122
    %1073 = vmatpush.msra.mxu0 %v121
    %1074 = vmatpush.msra.mxu0 %v120
    %1075 = vmatpush.msra.mxu0 %v119
    %1076 = vmatpush.msra.mxu0 %v118
    %1077 = vmatpush.msra.mxu0 %v117
    %1078 = vmatpush.msra.mxu0 %v116
    %1079 = vmatpush.msra.mxu0 %v115
    %1080 = vmatpush.msra.mxu0 %v114
    %1081 = vmatpush.msra.mxu0 %v113
    %1082 = vmatpush.msra.mxu0 %v112
    %1083 = vmatpush.msra.mxu0 %v111
    %1084 = vmatpush.msra.mxu0 %v110
    %1085 = vmatmul.f32.gmra.mxu0 %v1041
    %v1086 = vpop.f32.mrf.mxu0
    %v1087 = vadd.f32 %v1067, %v1086
    %1088 = vdwg.mxu0
    %v1089 = vrot.slane %v1041, 2
    %1091 = vmatpush.msra.mxu0 %v329
    %1092 = vmatpush.msra.mxu0 %v328
    %1093 = vmatpush.msra.mxu0 %v327
    %1094 = vmatpush.msra.mxu0 %v326
    %1095 = vmatpush.msra.mxu0 %v325
    %1096 = vmatpush.msra.mxu0 %v324
    %1097 = vmatpush.msra.mxu0 %v323
    %1098 = vmatpush.msra.mxu0 %v322
    %1099 = vmatpush.msra.mxu0 %v321
    %1100 = vmatpush.msra.mxu0 %v320
    %1101 = vmatpush.msra.mxu0 %v319
    %1102 = vmatpush.msra.mxu0 %v318
    %1103 = vmatpush.msra.mxu0 %v317
    %1104 = vmatpush.msra.mxu0 %v316
    %1105 = vmatpush.msra.mxu0 %v315
    %1106 = vmatpush.msra.mxu0 %v314
    %1107 = vmatmul.f32.gmra.mxu0 %v1089
    %v1108 = vpop.f32.mrf.mxu0
    %v1109 = vadd.f32 0.0, %v1108
    %1110 = vdwg.mxu0
    %v1111 = vadd.f32 %v1087, %v1109
    %v1112 = vrot.slane %v1041, 3
    %1114 = vmatpush.msra.mxu0 %v431
    %1115 = vmatpush.msra.mxu0 %v430
    %1116 = vmatpush.msra.mxu0 %v429
    %1117 = vmatpush.msra.mxu0 %v428
    %1118 = vmatpush.msra.mxu0 %v427
    %1119 = vmatpush.msra.mxu0 %v426
    %1120 = vmatpush.msra.mxu0 %v425
    %1121 = vmatpush.msra.mxu0 %v424
    %1122 = vmatpush.msra.mxu0 %v423
    %1123 = vmatpush.msra.mxu0 %v422
    %1124 = vmatpush.msra.mxu0 %v421
    %1125 = vmatpush.msra.mxu0 %v420
    %1126 = vmatpush.msra.mxu0 %v419
    %1127 = vmatpush.msra.mxu0 %v418
    %1128 = vmatpush.msra.mxu0 %v417
    %1129 = vmatpush.msra.mxu0 %v416
    %1130 = vmatmul.f32.gmra.mxu0 %v1112
    %v1131 = vpop.f32.mrf.mxu0
    %v1132 = vadd.f32 0.0, %v1131
    %1133 = vdwg.mxu0
    %v1134 = vadd.f32 %v1111, %v1132
    %v1135 = vrot.slane %v1041, 4
    %v1137 = vadd.f32 %v1134, %v1135
    %v1138 = vrot.slane %v1041, 5
    %1140 = vmatpush.msra.mxu0 %v584
    %1141 = vmatpush.msra.mxu0 %v583
    %1142 = vmatpush.msra.mxu0 %v582
    %1143 = vmatpush.msra.mxu0 %v581
    %1144 = vmatpush.msra.mxu0 %v580
    %1145 = vmatpush.msra.mxu0 %v579
    %1146 = vmatpush.msra.mxu0 %v578
    %1147 = vmatpush.msra.mxu0 %v577
    %1148 = vmatpush.msra.mxu0 %v576
    %1149 = vmatpush.msra.mxu0 %v575
    %1150 = vmatpush.msra.mxu0 %v574
    %1151 = vmatpush.msra.mxu0 %v573
    %1152 = vmatpush.msra.mxu0 %v572
    %1153 = vmatpush.msra.mxu0 %v571
    %1154 = vmatpush.msra.mxu0 %v570
    %1155 = vmatpush.msra.mxu0 %v569
    %1156 = vmatmul.f32.gmra.mxu0 %v1138
    %v1157 = vpop.f32.mrf.mxu0
    %v1158 = vadd.f32 0.0, %v1157
    %1159 = vdwg.mxu0
    %v1160 = vadd.f32 %v1137, %v1158
    %v1161 = vrot.slane %v1041, 6
    %1163 = vmatpush.msra.mxu0 %v686
    %1164 = vmatpush.msra.mxu0 %v685
    %1165 = vmatpush.msra.mxu0 %v684
    %1166 = vmatpush.msra.mxu0 %v683
    %1167 = vmatpush.msra.mxu0 %v682
    %1168 = vmatpush.msra.mxu0 %v681
    %1169 = vmatpush.msra.mxu0 %v680
    %1170 = vmatpush.msra.mxu0 %v679
    %1171 = vmatpush.msra.mxu0 %v678
    %1172 = vmatpush.msra.mxu0 %v677
    %1173 = vmatpush.msra.mxu0 %v676
    %1174 = vmatpush.msra.mxu0 %v675
    %1175 = vmatpush.msra.mxu0 %v674
    %1176 = vmatpush.msra.mxu0 %v673
    %1177 = vmatpush.msra.mxu0 %v672
    %1178 = vmatpush.msra.mxu0 %v671
    %1179 = vmatmul.f32.gmra.mxu0 %v1161
    %v1180 = vpop.f32.mrf.mxu0
    %v1181 = vadd.f32 0.0, %v1180
    %1182 = vdwg.mxu0
    %v1183 = vadd.f32 %v1160, %v1181
    %v1184 = vrot.slane %v1041, 7
    %1186 = vmatpush.msra.mxu0 %v788
    %1187 = vmatpush.msra.mxu0 %v787
    %1188 = vmatpush.msra.mxu0 %v786
    %1189 = vmatpush.msra.mxu0 %v785
    %1190 = vmatpush.msra.mxu0 %v784
    %1191 = vmatpush.msra.mxu0 %v783
    %1192 = vmatpush.msra.mxu0 %v782
    %1193 = vmatpush.msra.mxu0 %v781
    %1194 = vmatpush.msra.mxu0 %v780
    %1195 = vmatpush.msra.mxu0 %v779
    %1196 = vmatpush.msra.mxu0 %v778
    %1197 = vmatpush.msra.mxu0 %v777
    %1198 = vmatpush.msra.mxu0 %v776
    %1199 = vmatpush.msra.mxu0 %v775
    %1200 = vmatpush.msra.mxu0 %v774
    %1201 = vmatpush.msra.mxu0 %v773
    %1202 = vmatmul.f32.gmra.mxu0 %v1184
    %v1203 = vpop.f32.mrf.mxu0
    %v1204 = vadd.f32 0.0, %v1203
    %1205 = vdwg.mxu0
    %v1206 = vadd.f32 %v1183, %v1204
    %1207 = vmatpush.msra.mxu0 %v890
    %1208 = vmatpush.msra.mxu0 %v889
    %1209 = vmatpush.msra.mxu0 %v888
    %1210 = vmatpush.msra.mxu0 %v887
    %1211 = vmatpush.msra.mxu0 %v886
    %1212 = vmatpush.msra.mxu0 %v885
    %1213 = vmatpush.msra.mxu0 %v884
    %1214 = vmatpush.msra.mxu0 %v883
    %1215 = vmatpush.msra.mxu0 %v882
    %1216 = vmatpush.msra.mxu0 %v881
    %1217 = vmatpush.msra.mxu0 %v880
    %1218 = vmatpush.msra.mxu0 %v879
    %1219 = vmatpush.msra.mxu0 %v878
    %1220 = vmatpush.msra.mxu0 %v877
    %1221 = vmatpush.msra.mxu0 %v876
    %1222 = vmatpush.msra.mxu0 %v875
    %1223 = vmatmul.f32.gmra.mxu0 %v1044
    %v1224 = vpop.f32.mrf.mxu0
    %v1225 = vadd.f32 0.0, %v1224
    %1226 = vdwg.mxu0
    %v1227 = vadd.f32 %v1206, %v1225
    %v1228 = vstv %s88
    %v1229 = vadd.f32 %v1227, %v1228
    %v1230 = vmax.f32 %v1229, 0.0
    %vm1231 = vcmask 1040384
    %v1232 = vsel %vm1231, %v1230, 0.0
    %1233 = vadd.xlane.f32.xlu0 %v1232
    %v1234 = vpop.xlane.xlu0 %1233
    %v1235 = vrot.slane %v1234, 4
    %v1236 = vadd.f32 %v1234, %v1235
    %v1237 = vrot.slane %v1236, 2
    %v1238 = vadd.f32 %v1236, %v1237
    %v1239 = vrot.slane %v1238, 1
    %v1240 = vadd.f32 %v1238, %v1239
    %s1241 = vtos %v1240
    %v1242 = vrcp.pop 128.0
    %v1243 = vmul.f32 128.0, %v1242
    %v1244 = vsub.f32 1.0, %v1243
    %v1245 = vmul.f32 %v1242, %v1244
    %v1246 = vadd.f32 %v1242, %v1245
    %vm1247 = vweird.f32 %v1242
    %v1248 = vsel %vm1247, %v1242, %v1246
    %s1249 = vtos %v1248
    %s1250 = smul.f32 %s1241, %s1249
    %v1251 = vstv %s1250
    %v1252 = vsub.f32 %v1230, %v1251
    %v1253 = vmul.f32 %v1252, %v1252
    %v1254 = vsel %vm1231, %v1253, 0.0
    %1255 = vadd.xlane.f32.xlu0 %v1254
    %v1256 = vpop.xlane.xlu0 %1255
    %v1257 = vrot.slane %v1256, 4
    %v1258 = vadd.f32 %v1256, %v1257
    %v1259 = vrot.slane %v1258, 2
    %v1260 = vadd.f32 %v1258, %v1259
    %v1261 = vrot.slane %v1260, 1
    %v1262 = vadd.f32 %v1260, %v1261
    %s1263 = vtos %v1262
    %v1264 = vrcp.pop 128.0
    %v1265 = vmul.f32 128.0, %v1264
    %v1266 = vsub.f32 1.0, %v1265
    %v1267 = vmul.f32 %v1264, %v1266
    %v1268 = vadd.f32 %v1264, %v1267
    %vm1269 = vweird.f32 %v1264
    %v1270 = vsel %vm1269, %v1264, %v1268
    %s1271 = vtos %v1270
    %s1272 = smul.f32 %s1263, %s1271
    %s1273 = sadd.f32 %s1272, 1e-05
    %v1274 = vstv %s1273
    %v1275 = vrsqrt.pop %v1274
    %v1276 = vmul.f32 %v1275, %v1274
    %v1277 = vmul.f32 %v1276, %v1275
    %v1278 = vmul.f32 0.5, %v1277
    %v1279 = vsub.f32 1.5, %v1278
    %v1280 = vmul.f32 %v1275, %v1279
    %vm1281 = vweird.f32 %v1274
    %vm1282 = vweird.f32 %v1275
    %vm1283 = vmor %vm1281, %vm1282
    %v1284 = vsel %vm1283, %v1275, %v1280
    %s1285 = vtos %v1284
    %v1286 = vstv %s1285
    %v1287 = vmul.f32 %v1252, %v1286
    %v1288 = vstv %s90
    %v1289 = vmul.f32 %v1287, %v1288
    %v1290 = vstv %s91
    %v1291 = vadd.f32 %v1289, %v1290
    %1292 = vmatpush.msra.mxu0 %v125
    %1293 = vmatpush.msra.mxu0 %v124
    %1294 = vmatpush.msra.mxu0 %v123
    %1295 = vmatpush.msra.mxu0 %v122
    %1296 = vmatpush.msra.mxu0 %v121
    %1297 = vmatpush.msra.mxu0 %v120
    %1298 = vmatpush.msra.mxu0 %v119
    %1299 = vmatpush.msra.mxu0 %v118
    %1300 = vmatpush.msra.mxu0 %v117
    %1301 = vmatpush.msra.mxu0 %v116
    %1302 = vmatpush.msra.mxu0 %v115
    %1303 = vmatpush.msra.mxu0 %v114
    %1304 = vmatpush.msra.mxu0 %v113
    %1305 = vmatpush.msra.mxu0 %v112
    %1306 = vmatpush.msra.mxu0 %v111
    %1307 = vmatpush.msra.mxu0 %v110
    %1308 = vmatmul.f32.gmra.mxu0 %v1291
    %v1309 = vpop.f32.mrf.mxu0
    %v1310 = vadd.f32 0.0, %v1309
    %1311 = vdwg.mxu0
    %1313 = vset.pattern.permute.xlu0 0
    %1314 = vperm.xlu0 %1313, %v70
    %v1315 = vpop.permute.xlu0 %1314
    %1318 = vset.pattern.permute.xlu0 0
    %1319 = vperm.xlu0 %1318, %v71
    %v1320 = vpop.permute.xlu0 %1319
    %1323 = vset.pattern.permute.xlu0 0
    %1324 = vperm.xlu0 %1323, %v72
    %v1325 = vpop.permute.xlu0 %1324
    %1328 = vset.pattern.permute.xlu0 0
    %1329 = vperm.xlu0 %1328, %v73
    %v1330 = vpop.permute.xlu0 %1329
    %1333 = vset.pattern.permute.xlu0 0
    %1334 = vperm.xlu0 %1333, %v74
    %v1335 = vpop.permute.xlu0 %1334
    %1338 = vset.pattern.permute.xlu0 0
    %1339 = vperm.xlu0 %1338, %v75
    %v1340 = vpop.permute.xlu0 %1339
    %1343 = vset.pattern.permute.xlu0 0
    %1344 = vperm.xlu0 %1343, %v76
    %v1345 = vpop.permute.xlu0 %1344
    %1348 = vset.pattern.permute.xlu0 0
    %1349 = vperm.xlu0 %1348, %v77
    %v1350 = vpop.permute.xlu0 %1349
    %v1352 = vperm.slane %v1310, 0
    %v1353 = vmul.f32 %v1315, %v1352
    %v1354 = vmul.f32 %v1320, %v1352
    %v1355 = vmul.f32 %v1325, %v1352
    %v1356 = vmul.f32 %v1330, %v1352
    %v1357 = vmul.f32 %v1335, %v1352
    %v1358 = vmul.f32 %v1340, %v1352
    %v1359 = vmul.f32 %v1345, %v1352
    %v1360 = vmul.f32 %v1350, %v1352
    %1361 = vmatpush.msra.mxu0 %v227
    %1362 = vmatpush.msra.mxu0 %v226
    %1363 = vmatpush.msra.mxu0 %v225
    %1364 = vmatpush.msra.mxu0 %v224
    %1365 = vmatpush.msra.mxu0 %v223
    %1366 = vmatpush.msra.mxu0 %v222
    %1367 = vmatpush.msra.mxu0 %v221
    %1368 = vmatpush.msra.mxu0 %v220
    %1369 = vmatpush.msra.mxu0 %v219
    %1370 = vmatpush.msra.mxu0 %v218
    %1371 = vmatpush.msra.mxu0 %v217
    %1372 = vmatpush.msra.mxu0 %v216
    %1373 = vmatpush.msra.mxu0 %v215
    %1374 = vmatpush.msra.mxu0 %v214
    %1375 = vmatpush.msra.mxu0 %v213
    %1376 = vmatpush.msra.mxu0 %v212
    %1377 = vmatmul.f32.gmra.mxu0 %v1291
    %v1378 = vpop.f32.mrf.mxu0
    %v1379 = vadd.f32 0.0, %v1378
    %1380 = vdwg.mxu0
    %1381 = vset.pattern.permute.xlu0 1
    %1382 = vperm.xlu0 %1381, %v70
    %v1383 = vpop.permute.xlu0 %1382
    %1385 = vset.pattern.permute.xlu0 1
    %1386 = vperm.xlu0 %1385, %v71
    %v1387 = vpop.permute.xlu0 %1386
    %1389 = vset.pattern.permute.xlu0 1
    %1390 = vperm.xlu0 %1389, %v72
    %v1391 = vpop.permute.xlu0 %1390
    %1393 = vset.pattern.permute.xlu0 1
    %1394 = vperm.xlu0 %1393, %v73
    %v1395 = vpop.permute.xlu0 %1394
    %1397 = vset.pattern.permute.xlu0 1
    %1398 = vperm.xlu0 %1397, %v74
    %v1399 = vpop.permute.xlu0 %1398
    %1401 = vset.pattern.permute.xlu0 1
    %1402 = vperm.xlu0 %1401, %v75
    %v1403 = vpop.permute.xlu0 %1402
    %1405 = vset.pattern.permute.xlu0 1
    %1406 = vperm.xlu0 %1405, %v76
    %v1407 = vpop.permute.xlu0 %1406
    %1409 = vset.pattern.permute.xlu0 1
    %1410 = vperm.xlu0 %1409, %v77
    %v1411 = vpop.permute.xlu0 %1410
    %v1413 = vperm.slane %v1379, 0
    %v1414 = vmul.f32 %v1383, %v1413
    %v1415 = vmul.f32 %v1387, %v1413
    %v1416 = vmul.f32 %v1391, %v1413
    %v1417 = vmul.f32 %v1395, %v1413
    %v1418 = vmul.f32 %v1399, %v1413
    %v1419 = vmul.f32 %v1403, %v1413
    %v1420 = vmul.f32 %v1407, %v1413
    %v1421 = vmul.f32 %v1411, %v1413
    %v1422 = vadd.f32 %v1353, %v1414
    %v1423 = vadd.f32 %v1354, %v1415
    %v1424 = vadd.f32 %v1355, %v1416
    %v1425 = vadd.f32 %v1356, %v1417
    %v1426 = vadd.f32 %v1357, %v1418
    %v1427 = vadd.f32 %v1358, %v1419
    %v1428 = vadd.f32 %v1359, %v1420
    %v1429 = vadd.f32 %v1360, %v1421
    %1430 = vmatpush.msra.mxu0 %v329
    %1431 = vmatpush.msra.mxu0 %v328
    %1432 = vmatpush.msra.mxu0 %v327
    %1433 = vmatpush.msra.mxu0 %v326
    %1434 = vmatpush.msra.mxu0 %v325
    %1435 = vmatpush.msra.mxu0 %v324
    %1436 = vmatpush.msra.mxu0 %v323
    %1437 = vmatpush.msra.mxu0 %v322
    %1438 = vmatpush.msra.mxu0 %v321
    %1439 = vmatpush.msra.mxu0 %v320
    %1440 = vmatpush.msra.mxu0 %v319
    %1441 = vmatpush.msra.mxu0 %v318
    %1442 = vmatpush.msra.mxu0 %v317
    %1443 = vmatpush.msra.mxu0 %v316
    %1444 = vmatpush.msra.mxu0 %v315
    %1445 = vmatpush.msra.mxu0 %v314
    %1446 = vmatmul.f32.gmra.mxu0 %v1291
    %v1447 = vpop.f32.mrf.mxu0
    %v1448 = vadd.f32 0.0, %v1447
    %1449 = vdwg.mxu0
    %1450 = vset.pattern.permute.xlu0 2
    %1451 = vperm.xlu0 %1450, %v70
    %v1452 = vpop.permute.xlu0 %1451
    %1454 = vset.pattern.permute.xlu0 2
    %1455 = vperm.xlu0 %1454, %v71
    %v1456 = vpop.permute.xlu0 %1455
    %1458 = vset.pattern.permute.xlu0 2
    %1459 = vperm.xlu0 %1458, %v72
    %v1460 = vpop.permute.xlu0 %1459
    %1462 = vset.pattern.permute.xlu0 2
    %1463 = vperm.xlu0 %1462, %v73
    %v1464 = vpop.permute.xlu0 %1463
    %1466 = vset.pattern.permute.xlu0 2
    %1467 = vperm.xlu0 %1466, %v74
    %v1468 = vpop.permute.xlu0 %1467
    %1470 = vset.pattern.permute.xlu0 2
    %1471 = vperm.xlu0 %1470, %v75
    %v1472 = vpop.permute.xlu0 %1471
    %1474 = vset.pattern.permute.xlu0 2
    %1475 = vperm.xlu0 %1474, %v76
    %v1476 = vpop.permute.xlu0 %1475
    %1478 = vset.pattern.permute.xlu0 2
    %1479 = vperm.xlu0 %1478, %v77
    %v1480 = vpop.permute.xlu0 %1479
    %v1482 = vperm.slane %v1448, 0
    %v1483 = vmul.f32 %v1452, %v1482
    %v1484 = vmul.f32 %v1456, %v1482
    %v1485 = vmul.f32 %v1460, %v1482
    %v1486 = vmul.f32 %v1464, %v1482
    %v1487 = vmul.f32 %v1468, %v1482
    %v1488 = vmul.f32 %v1472, %v1482
    %v1489 = vmul.f32 %v1476, %v1482
    %v1490 = vmul.f32 %v1480, %v1482
    %v1491 = vadd.f32 %v1422, %v1483
    %v1492 = vadd.f32 %v1423, %v1484
    %v1493 = vadd.f32 %v1424, %v1485
    %v1494 = vadd.f32 %v1425, %v1486
    %v1495 = vadd.f32 %v1426, %v1487
    %v1496 = vadd.f32 %v1427, %v1488
    %v1497 = vadd.f32 %v1428, %v1489
    %v1498 = vadd.f32 %v1429, %v1490
    %1499 = vmatpush.msra.mxu0 %v431
    %1500 = vmatpush.msra.mxu0 %v430
    %1501 = vmatpush.msra.mxu0 %v429
    %1502 = vmatpush.msra.mxu0 %v428
    %1503 = vmatpush.msra.mxu0 %v427
    %1504 = vmatpush.msra.mxu0 %v426
    %1505 = vmatpush.msra.mxu0 %v425
    %1506 = vmatpush.msra.mxu0 %v424
    %1507 = vmatpush.msra.mxu0 %v423
    %1508 = vmatpush.msra.mxu0 %v422
    %1509 = vmatpush.msra.mxu0 %v421
    %1510 = vmatpush.msra.mxu0 %v420
    %1511 = vmatpush.msra.mxu0 %v419
    %1512 = vmatpush.msra.mxu0 %v418
    %1513 = vmatpush.msra.mxu0 %v417
    %1514 = vmatpush.msra.mxu0 %v416
    %1515 = vmatmul.f32.gmra.mxu0 %v1291
    %v1516 = vpop.f32.mrf.mxu0
    %v1517 = vadd.f32 0.0, %v1516
    %1518 = vdwg.mxu0
    %1519 = vset.pattern.permute.xlu0 3
    %1520 = vperm.xlu0 %1519, %v70
    %v1521 = vpop.permute.xlu0 %1520
    %1523 = vset.pattern.permute.xlu0 3
    %1524 = vperm.xlu0 %1523, %v71
    %v1525 = vpop.permute.xlu0 %1524
    %1527 = vset.pattern.permute.xlu0 3
    %1528 = vperm.xlu0 %1527, %v72
    %v1529 = vpop.permute.xlu0 %1528
    %1531 = vset.pattern.permute.xlu0 3
    %1532 = vperm.xlu0 %1531, %v73
    %v1533 = vpop.permute.xlu0 %1532
    %1535 = vset.pattern.permute.xlu0 3
    %1536 = vperm.xlu0 %1535, %v74
    %v1537 = vpop.permute.xlu0 %1536
    %1539 = vset.pattern.permute.xlu0 3
    %1540 = vperm.xlu0 %1539, %v75
    %v1541 = vpop.permute.xlu0 %1540
    %1543 = vset.pattern.permute.xlu0 3
    %1544 = vperm.xlu0 %1543, %v76
    %v1545 = vpop.permute.xlu0 %1544
    %1547 = vset.pattern.permute.xlu0 3
    %1548 = vperm.xlu0 %1547, %v77
    %v1549 = vpop.permute.xlu0 %1548
    %v1551 = vperm.slane %v1517, 0
    %v1552 = vmul.f32 %v1521, %v1551
    %v1553 = vmul.f32 %v1525, %v1551
    %v1554 = vmul.f32 %v1529, %v1551
    %v1555 = vmul.f32 %v1533, %v1551
    %v1556 = vmul.f32 %v1537, %v1551
    %v1557 = vmul.f32 %v1541, %v1551
    %v1558 = vmul.f32 %v1545, %v1551
    %v1559 = vmul.f32 %v1549, %v1551
    %v1560 = vadd.f32 %v1491, %v1552
    %v1561 = vadd.f32 %v1492, %v1553
    %v1562 = vadd.f32 %v1493, %v1554
    %v1563 = vadd.f32 %v1494, %v1555
    %v1564 = vadd.f32 %v1495, %v1556
    %v1565 = vadd.f32 %v1496, %v1557
    %v1566 = vadd.f32 %v1497, %v1558
    %v1567 = vadd.f32 %v1498, %v1559
    %1568 = vset.pattern.permute.xlu0 4
    %1569 = vperm.xlu0 %1568, %v70
    %v1570 = vpop.permute.xlu0 %1569
    %1572 = vset.pattern.permute.xlu0 4
    %1573 = vperm.xlu0 %1572, %v71
    %v1574 = vpop.permute.xlu0 %1573
    %1576 = vset.pattern.permute.xlu0 4
    %1577 = vperm.xlu0 %1576, %v72
    %v1578 = vpop.permute.xlu0 %1577
    %1580 = vset.pattern.permute.xlu0 4
    %1581 = vperm.xlu0 %1580, %v73
    %v1582 = vpop.permute.xlu0 %1581
    %1584 = vset.pattern.permute.xlu0 4
    %1585 = vperm.xlu0 %1584, %v74
    %v1586 = vpop.permute.xlu0 %1585
    %1588 = vset.pattern.permute.xlu0 4
    %1589 = vperm.xlu0 %1588, %v75
    %v1590 = vpop.permute.xlu0 %1589
    %1592 = vset.pattern.permute.xlu0 4
    %1593 = vperm.xlu0 %1592, %v76
    %v1594 = vpop.permute.xlu0 %1593
    %1596 = vset.pattern.permute.xlu0 4
    %1597 = vperm.xlu0 %1596, %v77
    %v1598 = vpop.permute.xlu0 %1597
    %v1600 = vperm.slane %v1291, 0
    %v1601 = vmul.f32 %v1570, %v1600
    %v1602 = vmul.f32 %v1574, %v1600
    %v1603 = vmul.f32 %v1578, %v1600
    %v1604 = vmul.f32 %v1582, %v1600
    %v1605 = vmul.f32 %v1586, %v1600
    %v1606 = vmul.f32 %v1590, %v1600
    %v1607 = vmul.f32 %v1594, %v1600
    %v1608 = vmul.f32 %v1598, %v1600
    %v1609 = vadd.f32 %v1560, %v1601
    %v1610 = vadd.f32 %v1561, %v1602
    %v1611 = vadd.f32 %v1562, %v1603
    %v1612 = vadd.f32 %v1563, %v1604
    %v1613 = vadd.f32 %v1564, %v1605
    %v1614 = vadd.f32 %v1565, %v1606
    %v1615 = vadd.f32 %v1566, %v1607
    %v1616 = vadd.f32 %v1567, %v1608
    %1617 = vmatpush.msra.mxu0 %v584
    %1618 = vmatpush.msra.mxu0 %v583
    %1619 = vmatpush.msra.mxu0 %v582
    %1620 = vmatpush.msra.mxu0 %v581
    %1621 = vmatpush.msra.mxu0 %v580
    %1622 = vmatpush.msra.mxu0 %v579
    %1623 = vmatpush.msra.mxu0 %v578
    %1624 = vmatpush.msra.mxu0 %v577
    %1625 = vmatpush.msra.mxu0 %v576
    %1626 = vmatpush.msra.mxu0 %v575
    %1627 = vmatpush.msra.mxu0 %v574
    %1628 = vmatpush.msra.mxu0 %v573
    %1629 = vmatpush.msra.mxu0 %v572
    %1630 = vmatpush.msra.mxu0 %v571
    %1631 = vmatpush.msra.mxu0 %v570
    %1632 = vmatpush.msra.mxu0 %v569
    %1633 = vmatmul.f32.gmra.mxu0 %v1291
    %v1634 = vpop.f32.mrf.mxu0
    %v1635 = vadd.f32 0.0, %v1634
    %1636 = vdwg.mxu0
    %1637 = vset.pattern.permute.xlu0 5
    %1638 = vperm.xlu0 %1637, %v70
    %v1639 = vpop.permute.xlu0 %1638
    %1641 = vset.pattern.permute.xlu0 5
    %1642 = vperm.xlu0 %1641, %v71
    %v1643 = vpop.permute.xlu0 %1642
    %1645 = vset.pattern.permute.xlu0 5
    %1646 = vperm.xlu0 %1645, %v72
    %v1647 = vpop.permute.xlu0 %1646
    %1649 = vset.pattern.permute.xlu0 5
    %1650 = vperm.xlu0 %1649, %v73
    %v1651 = vpop.permute.xlu0 %1650
    %1653 = vset.pattern.permute.xlu0 5
    %1654 = vperm.xlu0 %1653, %v74
    %v1655 = vpop.permute.xlu0 %1654
    %1657 = vset.pattern.permute.xlu0 5
    %1658 = vperm.xlu0 %1657, %v75
    %v1659 = vpop.permute.xlu0 %1658
    %1661 = vset.pattern.permute.xlu0 5
    %1662 = vperm.xlu0 %1661, %v76
    %v1663 = vpop.permute.xlu0 %1662
    %1665 = vset.pattern.permute.xlu0 5
    %1666 = vperm.xlu0 %1665, %v77
    %v1667 = vpop.permute.xlu0 %1666
    %v1669 = vperm.slane %v1635, 0
    %v1670 = vmul.f32 %v1639, %v1669
    %v1671 = vmul.f32 %v1643, %v1669
    %v1672 = vmul.f32 %v1647, %v1669
    %v1673 = vmul.f32 %v1651, %v1669
    %v1674 = vmul.f32 %v1655, %v1669
    %v1675 = vmul.f32 %v1659, %v1669
    %v1676 = vmul.f32 %v1663, %v1669
    %v1677 = vmul.f32 %v1667, %v1669
    %v1678 = vadd.f32 %v1609, %v1670
    %v1679 = vadd.f32 %v1610, %v1671
    %v1680 = vadd.f32 %v1611, %v1672
    %v1681 = vadd.f32 %v1612, %v1673
    %v1682 = vadd.f32 %v1613, %v1674
    %v1683 = vadd.f32 %v1614, %v1675
    %v1684 = vadd.f32 %v1615, %v1676
    %v1685 = vadd.f32 %v1616, %v1677
    %1686 = vmatpush.msra.mxu0 %v686
    %1687 = vmatpush.msra.mxu0 %v685
    %1688 = vmatpush.msra.mxu0 %v684
    %1689 = vmatpush.msra.mxu0 %v683
    %1690 = vmatpush.msra.mxu0 %v682
    %1691 = vmatpush.msra.mxu0 %v681
    %1692 = vmatpush.msra.mxu0 %v680
    %1693 = vmatpush.msra.mxu0 %v679
    %1694 = vmatpush.msra.mxu0 %v678
    %1695 = vmatpush.msra.mxu0 %v677
    %1696 = vmatpush.msra.mxu0 %v676
    %1697 = vmatpush.msra.mxu0 %v675
    %1698 = vmatpush.msra.mxu0 %v674
    %1699 = vmatpush.msra.mxu0 %v673
    %1700 = vmatpush.msra.mxu0 %v672
    %1701 = vmatpush.msra.mxu0 %v671
    %1702 = vmatmul.f32.gmra.mxu0 %v1291
    %v1703 = vpop.f32.mrf.mxu0
    %v1704 = vadd.f32 0.0, %v1703
    %1705 = vdwg.mxu0
    %1706 = vset.pattern.permute.xlu0 6
    %1707 = vperm.xlu0 %1706, %v70
    %v1708 = vpop.permute.xlu0 %1707
    %1710 = vset.pattern.permute.xlu0 6
    %1711 = vperm.xlu0 %1710, %v71
    %v1712 = vpop.permute.xlu0 %1711
    %1714 = vset.pattern.permute.xlu0 6
    %1715 = vperm.xlu0 %1714, %v72
    %v1716 = vpop.permute.xlu0 %1715
    %1718 = vset.pattern.permute.xlu0 6
    %1719 = vperm.xlu0 %1718, %v73
    %v1720 = vpop.permute.xlu0 %1719
    %1722 = vset.pattern.permute.xlu0 6
    %1723 = vperm.xlu0 %1722, %v74
    %v1724 = vpop.permute.xlu0 %1723
    %1726 = vset.pattern.permute.xlu0 6
    %1727 = vperm.xlu0 %1726, %v75
    %v1728 = vpop.permute.xlu0 %1727
    %1730 = vset.pattern.permute.xlu0 6
    %1731 = vperm.xlu0 %1730, %v76
    %v1732 = vpop.permute.xlu0 %1731
    %1734 = vset.pattern.permute.xlu0 6
    %1735 = vperm.xlu0 %1734, %v77
    %v1736 = vpop.permute.xlu0 %1735
    %v1738 = vperm.slane %v1704, 0
    %v1739 = vmul.f32 %v1708, %v1738
    %v1740 = vmul.f32 %v1712, %v1738
    %v1741 = vmul.f32 %v1716, %v1738
    %v1742 = vmul.f32 %v1720, %v1738
    %v1743 = vmul.f32 %v1724, %v1738
    %v1744 = vmul.f32 %v1728, %v1738
    %v1745 = vmul.f32 %v1732, %v1738
    %v1746 = vmul.f32 %v1736, %v1738
    %v1747 = vadd.f32 %v1678, %v1739
    %v1748 = vadd.f32 %v1679, %v1740
    %v1749 = vadd.f32 %v1680, %v1741
    %v1750 = vadd.f32 %v1681, %v1742
    %v1751 = vadd.f32 %v1682, %v1743
    %v1752 = vadd.f32 %v1683, %v1744
    %v1753 = vadd.f32 %v1684, %v1745
    %v1754 = vadd.f32 %v1685, %v1746
    %1755 = vmatpush.msra.mxu0 %v788
    %1756 = vmatpush.msra.mxu0 %v787
    %1757 = vmatpush.msra.mxu0 %v786
    %1758 = vmatpush.msra.mxu0 %v785
    %1759 = vmatpush.msra.mxu0 %v784
    %1760 = vmatpush.msra.mxu0 %v783
    %1761 = vmatpush.msra.mxu0 %v782
    %1762 = vmatpush.msra.mxu0 %v781
    %1763 = vmatpush.msra.mxu0 %v780
    %1764 = vmatpush.msra.mxu0 %v779
    %1765 = vmatpush.msra.mxu0 %v778
    %1766 = vmatpush.msra.mxu0 %v777
    %1767 = vmatpush.msra.mxu0 %v776
    %1768 = vmatpush.msra.mxu0 %v775
    %1769 = vmatpush.msra.mxu0 %v774
    %1770 = vmatpush.msra.mxu0 %v773
    %1771 = vmatmul.f32.gmra.mxu0 %v1291
    %v1772 = vpop.f32.mrf.mxu0
    %v1773 = vadd.f32 0.0, %v1772
    %1774 = vdwg.mxu0
    %1775 = vset.pattern.permute.xlu0 7
    %1776 = vperm.xlu0 %1775, %v70
    %v1777 = vpop.permute.xlu0 %1776
    %1779 = vset.pattern.permute.xlu0 7
    %1780 = vperm.xlu0 %1779, %v71
    %v1781 = vpop.permute.xlu0 %1780
    %1783 = vset.pattern.permute.xlu0 7
    %1784 = vperm.xlu0 %1783, %v72
    %v1785 = vpop.permute.xlu0 %1784
    %1787 = vset.pattern.permute.xlu0 7
    %1788 = vperm.xlu0 %1787, %v73
    %v1789 = vpop.permute.xlu0 %1788
    %1791 = vset.pattern.permute.xlu0 7
    %1792 = vperm.xlu0 %1791, %v74
    %v1793 = vpop.permute.xlu0 %1792
    %1795 = vset.pattern.permute.xlu0 7
    %1796 = vperm.xlu0 %1795, %v75
    %v1797 = vpop.permute.xlu0 %1796
    %1799 = vset.pattern.permute.xlu0 7
    %1800 = vperm.xlu0 %1799, %v76
    %v1801 = vpop.permute.xlu0 %1800
    %1803 = vset.pattern.permute.xlu0 7
    %1804 = vperm.xlu0 %1803, %v77
    %v1805 = vpop.permute.xlu0 %1804
    %v1807 = vperm.slane %v1773, 0
    %v1808 = vmul.f32 %v1777, %v1807
    %v1809 = vmul.f32 %v1781, %v1807
    %v1810 = vmul.f32 %v1785, %v1807
    %v1811 = vmul.f32 %v1789, %v1807
    %v1812 = vmul.f32 %v1793, %v1807
    %v1813 = vmul.f32 %v1797, %v1807
    %v1814 = vmul.f32 %v1801, %v1807
    %v1815 = vmul.f32 %v1805, %v1807
    %v1816 = vadd.f32 %v1747, %v1808
    %v1817 = vadd.f32 %v1748, %v1809
    %v1818 = vadd.f32 %v1749, %v1810
    %v1819 = vadd.f32 %v1750, %v1811
    %v1820 = vadd.f32 %v1751, %v1812
    %v1821 = vadd.f32 %v1752, %v1813
    %v1822 = vadd.f32 %v1753, %v1814
    %v1823 = vadd.f32 %v1754, %v1815
    %1824 = vmatpush.msra.mxu0 %v890
    %1825 = vmatpush.msra.mxu0 %v889
    %1826 = vmatpush.msra.mxu0 %v888
    %1827 = vmatpush.msra.mxu0 %v887
    %1828 = vmatpush.msra.mxu0 %v886
    %1829 = vmatpush.msra.mxu0 %v885
    %1830 = vmatpush.msra.mxu0 %v884
    %1831 = vmatpush.msra.mxu0 %v883
    %1832 = vmatpush.msra.mxu0 %v882
    %1833 = vmatpush.msra.mxu0 %v881
    %1834 = vmatpush.msra.mxu0 %v880
    %1835 = vmatpush.msra.mxu0 %v879
    %1836 = vmatpush.msra.mxu0 %v878
    %1837 = vmatpush.msra.mxu0 %v877
    %1838 = vmatpush.msra.mxu0 %v876
    %1839 = vmatpush.msra.mxu0 %v875
    %1840 = vmatmul.f32.gmra.mxu0 %v1291
    %v1841 = vpop.f32.mrf.mxu0
    %v1842 = vadd.f32 0.0, %v1841
    %1843 = vdwg.mxu0
    %1844 = vset.pattern.permute.xlu0 8
    %1845 = vperm.xlu0 %1844, %v70
    %v1846 = vpop.permute.xlu0 %1845
    %1848 = vset.pattern.permute.xlu0 8
    %1849 = vperm.xlu0 %1848, %v71
    %v1850 = vpop.permute.xlu0 %1849
    %1852 = vset.pattern.permute.xlu0 8
    %1853 = vperm.xlu0 %1852, %v72
    %v1854 = vpop.permute.xlu0 %1853
    %1856 = vset.pattern.permute.xlu0 8
    %1857 = vperm.xlu0 %1856, %v73
    %v1858 = vpop.permute.xlu0 %1857
    %1860 = vset.pattern.permute.xlu0 8
    %1861 = vperm.xlu0 %1860, %v74
    %v1862 = vpop.permute.xlu0 %1861
    %1864 = vset.pattern.permute.xlu0 8
    %1865 = vperm.xlu0 %1864, %v75
    %v1866 = vpop.permute.xlu0 %1865
    %1868 = vset.pattern.permute.xlu0 8
    %1869 = vperm.xlu0 %1868, %v76
    %v1870 = vpop.permute.xlu0 %1869
    %1872 = vset.pattern.permute.xlu0 8
    %1873 = vperm.xlu0 %1872, %v77
    %v1874 = vpop.permute.xlu0 %1873
    %v1876 = vperm.slane %v1842, 0
    %v1877 = vmul.f32 %v1846, %v1876
    %v1878 = vmul.f32 %v1850, %v1876
    %v1879 = vmul.f32 %v1854, %v1876
    %v1880 = vmul.f32 %v1858, %v1876
    %v1881 = vmul.f32 %v1862, %v1876
    %v1882 = vmul.f32 %v1866, %v1876
    %v1883 = vmul.f32 %v1870, %v1876
    %v1884 = vmul.f32 %v1874, %v1876
    %v1885 = vadd.f32 %v1816, %v1877
    %v1886 = vadd.f32 %v1817, %v1878
    %v1887 = vadd.f32 %v1818, %v1879
    %v1888 = vadd.f32 %v1819, %v1880
    %v1889 = vadd.f32 %v1820, %v1881
    %v1890 = vadd.f32 %v1821, %v1882
    %v1891 = vadd.f32 %v1822, %v1883
    %v1892 = vadd.f32 %v1823, %v1884
    %1894 = vset.pattern.permute.xlu0 0
    %1895 = vperm.xlu0 %1894, %v78
    %v1896 = vpop.permute.xlu0 %1895
    %1899 = vset.pattern.permute.xlu0 0
    %1900 = vperm.xlu0 %1899, %v79
    %v1901 = vpop.permute.xlu0 %1900
    %1904 = vset.pattern.permute.xlu0 0
    %1905 = vperm.xlu0 %1904, %v80
    %v1906 = vpop.permute.xlu0 %1905
    %1909 = vset.pattern.permute.xlu0 0
    %1910 = vperm.xlu0 %1909, %v81
    %v1911 = vpop.permute.xlu0 %1910
    %1914 = vset.pattern.permute.xlu0 0
    %1915 = vperm.xlu0 %1914, %v82
    %v1916 = vpop.permute.xlu0 %1915
    %1919 = vset.pattern.permute.xlu0 0
    %1920 = vperm.xlu0 %1919, %v83
    %v1921 = vpop.permute.xlu0 %1920
    %1924 = vset.pattern.permute.xlu0 0
    %1925 = vperm.xlu0 %1924, %v84
    %v1926 = vpop.permute.xlu0 %1925
    %1929 = vset.pattern.permute.xlu0 0
    %1930 = vperm.xlu0 %1929, %v85
    %v1931 = vpop.permute.xlu0 %1930
    %v1933 = vadd.f32 %v1885, %v1896
    %v1934 = vadd.f32 %v1886, %v1901
    %v1935 = vadd.f32 %v1887, %v1906
    %v1936 = vadd.f32 %v1888, %v1911
    %v1937 = vadd.f32 %v1889, %v1916
    %v1938 = vadd.f32 %v1890, %v1921
    %v1939 = vadd.f32 %v1891, %v1926
    %v1940 = vadd.f32 %v1892, %v1931
    %v1941 = vmax.f32 %v1933, 0.0
    %v1942 = vmax.f32 %v1934, 0.0
    %v1943 = vmax.f32 %v1935, 0.0
    %v1944 = vmax.f32 %v1936, 0.0
    %v1945 = vmax.f32 %v1937, 0.0
    %v1946 = vmax.f32 %v1938, 0.0
    %v1947 = vmax.f32 %v1939, 0.0
    %v1948 = vmax.f32 %v1940, 0.0
    %v1950 = vsel %vm1016, %v86, 0
    %v1953 = vsel %vm1016, %v87, 0
    %1955 = vmatpush.msra.mxu0 0.0
    %1956 = vmatpush.msra.mxu0 0.0
    %1957 = vmatpush.msra.mxu0 0.0
    %1958 = vmatpush.msra.mxu0 0.0
    %1959 = vmatpush.msra.mxu0 0.0
    %1960 = vmatpush.msra.mxu0 0.0
    %1961 = vmatpush.msra.mxu0 0.0
    %1962 = vmatpush.msra.mxu0 0.0
    %1963 = vmatpush.msra.mxu0 %v1948
    %1964 = vmatpush.msra.mxu0 %v1947
    %1965 = vmatpush.msra.mxu0 %v1946
    %1966 = vmatpush.msra.mxu0 %v1945
    %1967 = vmatpush.msra.mxu0 %v1944
    %1968 = vmatpush.msra.mxu0 %v1943
    %1969 = vmatpush.msra.mxu0 %v1942
    %1970 = vmatpush.msra.mxu0 %v1941
    %1971 = vmatmul.f32.gmra.mxu0 %v1950
    %v1972 = vpop.f32.mrf.mxu0
    %v1973 = vadd.f32 0.0, %v1972
    %1974 = vmatmul.f32.gmra.mxu0 %v1953
    %v1975 = vpop.f32.mrf.mxu0
    %v1976 = vadd.f32 0.0, %v1975
    %1977 = vdwg.mxu0
    %v1979 = vrot.slane %v1973, 1
    %1981 = vmatpush.msra.mxu0 %v227
    %1982 = vmatpush.msra.mxu0 %v226
    %1983 = vmatpush.msra.mxu0 %v225
    %1984 = vmatpush.msra.mxu0 %v224
    %1985 = vmatpush.msra.mxu0 %v223
    %1986 = vmatpush.msra.mxu0 %v222
    %1987 = vmatpush.msra.mxu0 %v221
    %1988 = vmatpush.msra.mxu0 %v220
    %1989 = vmatpush.msra.mxu0 %v219
    %1990 = vmatpush.msra.mxu0 %v218
    %1991 = vmatpush.msra.mxu0 %v217
    %1992 = vmatpush.msra.mxu0 %v216
    %1993 = vmatpush.msra.mxu0 %v215
    %1994 = vmatpush.msra.mxu0 %v214
    %1995 = vmatpush.msra.mxu0 %v213
    %1996 = vmatpush.msra.mxu0 %v212
    %1997 = vmatmul.f32.gmra.mxu0 %v1979
    %v1998 = vpop.f32.mrf.mxu0
    %v1999 = vadd.f32 0.0, %v1998
    %2000 = vdwg.mxu0
    %2001 = vmatpush.msra.mxu0 %v125
    %2002 = vmatpush.msra.mxu0 %v124
    %2003 = vmatpush.msra.mxu0 %v123
    %2004 = vmatpush.msra.mxu0 %v122
    %2005 = vmatpush.msra.mxu0 %v121
    %2006 = vmatpush.msra.mxu0 %v120
    %2007 = vmatpush.msra.mxu0 %v119
    %2008 = vmatpush.msra.mxu0 %v118
    %2009 = vmatpush.msra.mxu0 %v117
    %2010 = vmatpush.msra.mxu0 %v116
    %2011 = vmatpush.msra.mxu0 %v115
    %2012 = vmatpush.msra.mxu0 %v114
    %2013 = vmatpush.msra.mxu0 %v113
    %2014 = vmatpush.msra.mxu0 %v112
    %2015 = vmatpush.msra.mxu0 %v111
    %2016 = vmatpush.msra.mxu0 %v110
    %2017 = vmatmul.f32.gmra.mxu0 %v1973
    %v2018 = vpop.f32.mrf.mxu0
    %v2019 = vadd.f32 %v1999, %v2018
    %2020 = vdwg.mxu0
    %v2021 = vrot.slane %v1973, 2
    %2023 = vmatpush.msra.mxu0 %v329
    %2024 = vmatpush.msra.mxu0 %v328
    %2025 = vmatpush.msra.mxu0 %v327
    %2026 = vmatpush.msra.mxu0 %v326
    %2027 = vmatpush.msra.mxu0 %v325
    %2028 = vmatpush.msra.mxu0 %v324
    %2029 = vmatpush.msra.mxu0 %v323
    %2030 = vmatpush.msra.mxu0 %v322
    %2031 = vmatpush.msra.mxu0 %v321
    %2032 = vmatpush.msra.mxu0 %v320
    %2033 = vmatpush.msra.mxu0 %v319
    %2034 = vmatpush.msra.mxu0 %v318
    %2035 = vmatpush.msra.mxu0 %v317
    %2036 = vmatpush.msra.mxu0 %v316
    %2037 = vmatpush.msra.mxu0 %v315
    %2038 = vmatpush.msra.mxu0 %v314
    %2039 = vmatmul.f32.gmra.mxu0 %v2021
    %v2040 = vpop.f32.mrf.mxu0
    %v2041 = vadd.f32 0.0, %v2040
    %2042 = vdwg.mxu0
    %v2043 = vadd.f32 %v2019, %v2041
    %v2044 = vrot.slane %v1973, 3
    %2046 = vmatpush.msra.mxu0 %v431
    %2047 = vmatpush.msra.mxu0 %v430
    %2048 = vmatpush.msra.mxu0 %v429
    %2049 = vmatpush.msra.mxu0 %v428
    %2050 = vmatpush.msra.mxu0 %v427
    %2051 = vmatpush.msra.mxu0 %v426
    %2052 = vmatpush.msra.mxu0 %v425
    %2053 = vmatpush.msra.mxu0 %v424
    %2054 = vmatpush.msra.mxu0 %v423
    %2055 = vmatpush.msra.mxu0 %v422
    %2056 = vmatpush.msra.mxu0 %v421
    %2057 = vmatpush.msra.mxu0 %v420
    %2058 = vmatpush.msra.mxu0 %v419
    %2059 = vmatpush.msra.mxu0 %v418
    %2060 = vmatpush.msra.mxu0 %v417
    %2061 = vmatpush.msra.mxu0 %v416
    %2062 = vmatmul.f32.gmra.mxu0 %v2044
    %v2063 = vpop.f32.mrf.mxu0
    %v2064 = vadd.f32 0.0, %v2063
    %2065 = vdwg.mxu0
    %v2066 = vadd.f32 %v2043, %v2064
    %v2067 = vrot.slane %v1973, 4
    %v2069 = vadd.f32 %v2066, %v2067
    %v2070 = vrot.slane %v1973, 5
    %2072 = vmatpush.msra.mxu0 %v584
    %2073 = vmatpush.msra.mxu0 %v583
    %2074 = vmatpush.msra.mxu0 %v582
    %2075 = vmatpush.msra.mxu0 %v581
    %2076 = vmatpush.msra.mxu0 %v580
    %2077 = vmatpush.msra.mxu0 %v579
    %2078 = vmatpush.msra.mxu0 %v578
    %2079 = vmatpush.msra.mxu0 %v577
    %2080 = vmatpush.msra.mxu0 %v576
    %2081 = vmatpush.msra.mxu0 %v575
    %2082 = vmatpush.msra.mxu0 %v574
    %2083 = vmatpush.msra.mxu0 %v573
    %2084 = vmatpush.msra.mxu0 %v572
    %2085 = vmatpush.msra.mxu0 %v571
    %2086 = vmatpush.msra.mxu0 %v570
    %2087 = vmatpush.msra.mxu0 %v569
    %2088 = vmatmul.f32.gmra.mxu0 %v2070
    %v2089 = vpop.f32.mrf.mxu0
    %v2090 = vadd.f32 0.0, %v2089
    %2091 = vdwg.mxu0
    %v2092 = vadd.f32 %v2069, %v2090
    %v2093 = vrot.slane %v1973, 6
    %2095 = vmatpush.msra.mxu0 %v686
    %2096 = vmatpush.msra.mxu0 %v685
    %2097 = vmatpush.msra.mxu0 %v684
    %2098 = vmatpush.msra.mxu0 %v683
    %2099 = vmatpush.msra.mxu0 %v682
    %2100 = vmatpush.msra.mxu0 %v681
    %2101 = vmatpush.msra.mxu0 %v680
    %2102 = vmatpush.msra.mxu0 %v679
    %2103 = vmatpush.msra.mxu0 %v678
    %2104 = vmatpush.msra.mxu0 %v677
    %2105 = vmatpush.msra.mxu0 %v676
    %2106 = vmatpush.msra.mxu0 %v675
    %2107 = vmatpush.msra.mxu0 %v674
    %2108 = vmatpush.msra.mxu0 %v673
    %2109 = vmatpush.msra.mxu0 %v672
    %2110 = vmatpush.msra.mxu0 %v671
    %2111 = vmatmul.f32.gmra.mxu0 %v2093
    %v2112 = vpop.f32.mrf.mxu0
    %v2113 = vadd.f32 0.0, %v2112
    %2114 = vdwg.mxu0
    %v2115 = vadd.f32 %v2092, %v2113
    %v2116 = vrot.slane %v1973, 7
    %2118 = vmatpush.msra.mxu0 %v788
    %2119 = vmatpush.msra.mxu0 %v787
    %2120 = vmatpush.msra.mxu0 %v786
    %2121 = vmatpush.msra.mxu0 %v785
    %2122 = vmatpush.msra.mxu0 %v784
    %2123 = vmatpush.msra.mxu0 %v783
    %2124 = vmatpush.msra.mxu0 %v782
    %2125 = vmatpush.msra.mxu0 %v781
    %2126 = vmatpush.msra.mxu0 %v780
    %2127 = vmatpush.msra.mxu0 %v779
    %2128 = vmatpush.msra.mxu0 %v778
    %2129 = vmatpush.msra.mxu0 %v777
    %2130 = vmatpush.msra.mxu0 %v776
    %2131 = vmatpush.msra.mxu0 %v775
    %2132 = vmatpush.msra.mxu0 %v774
    %2133 = vmatpush.msra.mxu0 %v773
    %2134 = vmatmul.f32.gmra.mxu0 %v2116
    %v2135 = vpop.f32.mrf.mxu0
    %v2136 = vadd.f32 0.0, %v2135
    %2137 = vdwg.mxu0
    %v2138 = vadd.f32 %v2115, %v2136
    %2139 = vmatpush.msra.mxu0 %v890
    %2140 = vmatpush.msra.mxu0 %v889
    %2141 = vmatpush.msra.mxu0 %v888
    %2142 = vmatpush.msra.mxu0 %v887
    %2143 = vmatpush.msra.mxu0 %v886
    %2144 = vmatpush.msra.mxu0 %v885
    %2145 = vmatpush.msra.mxu0 %v884
    %2146 = vmatpush.msra.mxu0 %v883
    %2147 = vmatpush.msra.mxu0 %v882
    %2148 = vmatpush.msra.mxu0 %v881
    %2149 = vmatpush.msra.mxu0 %v880
    %2150 = vmatpush.msra.mxu0 %v879
    %2151 = vmatpush.msra.mxu0 %v878
    %2152 = vmatpush.msra.mxu0 %v877
    %2153 = vmatpush.msra.mxu0 %v876
    %2154 = vmatpush.msra.mxu0 %v875
    %2155 = vmatmul.f32.gmra.mxu0 %v1976
    %v2156 = vpop.f32.mrf.mxu0
    %v2157 = vadd.f32 0.0, %v2156
    %2158 = vdwg.mxu0
    %v2159 = vadd.f32 %v2138, %v2157
    %v2160 = vstv %s89
    %v2161 = vadd.f32 %v2159, %v2160
    %v2162 = vmax.f32 %v2161, 0.0
    %v2163 = vsel %vm1231, %v2162, 0.0
    %2164 = vadd.xlane.f32.xlu0 %v2163
    %v2165 = vpop.xlane.xlu0 %2164
    %v2166 = vrot.slane %v2165, 4
    %v2167 = vadd.f32 %v2165, %v2166
    %v2168 = vrot.slane %v2167, 2
    %v2169 = vadd.f32 %v2167, %v2168
    %v2170 = vrot.slane %v2169, 1
    %v2171 = vadd.f32 %v2169, %v2170
    %s2172 = vtos %v2171
    %v2173 = vrcp.pop 128.0
    %v2174 = vmul.f32 128.0, %v2173
    %v2175 = vsub.f32 1.0, %v2174
    %v2176 = vmul.f32 %v2173, %v2175
    %v2177 = vadd.f32 %v2173, %v2176
    %vm2178 = vweird.f32 %v2173
    %v2179 = vsel %vm2178, %v2173, %v2177
    %s2180 = vtos %v2179
    %s2181 = smul.f32 %s2172, %s2180
    %v2182 = vstv %s2181
    %v2183 = vsub.f32 %v2162, %v2182
    %v2184 = vmul.f32 %v2183, %v2183
    %v2185 = vsel %vm1231, %v2184, 0.0
    %2186 = vadd.xlane.f32.xlu0 %v2185
    %v2187 = vpop.xlane.xlu0 %2186
    %v2188 = vrot.slane %v2187, 4
    %v2189 = vadd.f32 %v2187, %v2188
    %v2190 = vrot.slane %v2189, 2
    %v2191 = vadd.f32 %v2189, %v2190
    %v2192 = vrot.slane %v2191, 1
    %v2193 = vadd.f32 %v2191, %v2192
    %s2194 = vtos %v2193
    %v2195 = vrcp.pop 128.0
    %v2196 = vmul.f32 128.0, %v2195
    %v2197 = vsub.f32 1.0, %v2196
    %v2198 = vmul.f32 %v2195, %v2197
    %v2199 = vadd.f32 %v2195, %v2198
    %vm2200 = vweird.f32 %v2195
    %v2201 = vsel %vm2200, %v2195, %v2199
    %s2202 = vtos %v2201
    %s2203 = smul.f32 %s2194, %s2202
    %s2204 = sadd.f32 %s2203, 1e-05
    %v2205 = vstv %s2204
    %v2206 = vrsqrt.pop %v2205
    %v2207 = vmul.f32 %v2206, %v2205
    %v2208 = vmul.f32 %v2207, %v2206
    %v2209 = vmul.f32 0.5, %v2208
    %v2210 = vsub.f32 1.5, %v2209
    %v2211 = vmul.f32 %v2206, %v2210
    %vm2212 = vweird.f32 %v2205
    %vm2213 = vweird.f32 %v2206
    %vm2214 = vmor %vm2212, %vm2213
    %v2215 = vsel %vm2214, %v2206, %v2211
    %s2216 = vtos %v2215
    %v2217 = vstv %s2216
    %v2218 = vmul.f32 %v2183, %v2217
    %v2219 = vstv %s92
    %v2220 = vmul.f32 %v2218, %v2219
    %v2221 = vstv %s93
    %v2222 = vadd.f32 %v2220, %v2221
    %v2223 = vld [vmem:[%s8] sm:$0xff]
    %v2224 = vld [vmem:[%s8 + $0x8] sm:$0xff]
    %v2225 = vld [vmem:[%s8 + $0x10] sm:$0xff]
    %v2226 = vld [vmem:[%s8 + $0x18] sm:$0xff]
    %v2227 = vld [vmem:[%s8 + $0x20] sm:$0xff]
    %v2228 = vld [vmem:[%s8 + $0x28] sm:$0xff]
    %v2229 = vld [vmem:[%s8 + $0x30] sm:$0xff]
    %v2230 = vld [vmem:[%s8 + $0x38] sm:$0xff]
    %v2231 = vld [vmem:[%s8 + $0x40] sm:$0xff]
    %v2232 = vld [vmem:[%s8 + $0x48] sm:$0xff]
    %v2233 = vld [vmem:[%s8 + $0x50] sm:$0xff]
    %v2234 = vld [vmem:[%s8 + $0x58] sm:$0xff]
    %v2235 = vld [vmem:[%s8 + $0x60] sm:$0xff]
    %v2236 = vld [vmem:[%s8 + $0x68] sm:$0xff]
    %v2237 = vld [vmem:[%s8 + $0x70] sm:$0xff]
    %v2238 = vld [vmem:[%s8 + $0x78] sm:$0xff]
    %2239 = vmatpush.msra.mxu0 %v2238
    %2240 = vmatpush.msra.mxu0 %v2237
    %2241 = vmatpush.msra.mxu0 %v2236
    %2242 = vmatpush.msra.mxu0 %v2235
    %2243 = vmatpush.msra.mxu0 %v2234
    %2244 = vmatpush.msra.mxu0 %v2233
    %2245 = vmatpush.msra.mxu0 %v2232
    %2246 = vmatpush.msra.mxu0 %v2231
    %2247 = vmatpush.msra.mxu0 %v2230
    %2248 = vmatpush.msra.mxu0 %v2229
    %2249 = vmatpush.msra.mxu0 %v2228
    %2250 = vmatpush.msra.mxu0 %v2227
    %2251 = vmatpush.msra.mxu0 %v2226
    %2252 = vmatpush.msra.mxu0 %v2225
    %2253 = vmatpush.msra.mxu0 %v2224
    %2254 = vmatpush.msra.mxu0 %v2223
    %2255 = vmatmul.f32.gmra.mxu0 %v2222
    %v2256 = vpop.f32.mrf.mxu0
    %v2257 = vadd.f32 0.0, %v2256
    %2258 = vdwg.mxu0
    %v2259 = vadd.f32 %v2222, %v2257
    %v2260 = vld [vmem:[%s9] sm:$0x1]
    %v2261 = vadd.f32 %v2259, %v2260
    %2262 = vst [vmem:[%s11] sm:$0x1] %v2261
    // Predicated region
    $region50: #{net_forward.1} parent=1 // pred_check
      _
    $region51: #{net_forward.1} parent=1 // pred_check_branch
      %2264 = sbr.rel (0) target = $region53
    $region52: #{net_forward.1} parent=1 // pred_region
      _
    $region53: #{net_forward.1} parent=1 // pred_fallthru
      _
    // Predicated region
    $region54: #{net_forward.1} parent=1 // pred_check
      _
    $region55: #{net_forward.1} parent=1 // pred_check_branch
      %2266 = sbr.rel (0) target = $region57
    $region56: #{net_forward.1} parent=1 // pred_region
      _
    $region57: #{net_forward.1} parent=1 // pred_fallthru
      _
    %2267 = vsyncpa [#allocation3], 1

</llo_original>
